<compile_context>
chip_gen: v5e
topology: v5e:2x2
jax: 0.10.0
libtpu: 0.0.40
codegen_flags: <defaults>
</compile_context>

<pallas_src>
import jax
import jax.numpy as jnp
from jax.experimental import pallas as pl
from jax.experimental.pallas import tpu as pltpu


def _action_score_kernel(x_ref, w1_ref, b1_ref, w2_ref, b2_ref, o_ref):
    # x:  (TM, D)   w1: (D, D)   b1: (1, D)
    # w2: (1, D)    b2: (1,) in SMEM          o: (1, 1, TM)  lane-dense
    x = x_ref[...]
    # mlp1 + leaky_relu (negative_slope = 0.01, PyTorch default); MXU matmul
    # with f32 accumulation regardless of the input dtype.
    h = jnp.dot(x, w1_ref[...], preferred_element_type=jnp.float32) + b1_ref[...]
    h = jnp.where(h > 0, h, 0.01 * h)
    # mlp2 as a per-row dot product: VPU multiply by the (1, D) weight row and
    # a lane reduce (XLU) instead of a degenerate 1-wide MXU matmul.
    s = jnp.sum(h * w2_ref[...], axis=-1) + b2_ref[0]          # (TM,)
    # sigmoid routes exp/reciprocal to the EUP slot; store lane-dense.
    o_ref[...] = jax.nn.sigmoid(s)[None, None, :].astype(o_ref.dtype)


def _round_up(x, m):
    return ((x + m - 1) // m) * m


def _choose_tm(n_rows, feat_dim, itemsize):
    # ~2 MiB of feats per block: big enough to amortize the ~0.35 us/step grid
    # overhead and saturate the HBM stream, while 2x (double buffer) + weights
    # stays far below v7x's 32 MiB scoped-VMEM default.
    budget_bytes = 2 * 1024 * 1024
    tm = budget_bytes // max(feat_dim * itemsize, 1)
    tm = max(256, min(16384, (tm // 256) * 256))
    # Never tile wider than the (padded) problem itself.
    return min(tm, _round_up(max(n_rows, 1), 256))


def action_score(feats, w1, b1, w2, b2):
    """feats: (N, D). w1: (D, D) stored (in, out). b1: (D,). w2: (D, 1) or (D,).
    b2: (1,) or scalar. Returns (N,) f32, matching ActionScore.forward."""
    N, D = feats.shape
    TM = _choose_tm(N, D, feats.dtype.itemsize)
    num_tiles = pl.cdiv(N, TM)
    n_pad = num_tiles * TM
    if n_pad != N:
        # Rows are independent; padded rows are computed and discarded.
        feats = jnp.pad(feats, ((0, n_pad - N), (0, 0)))

    w1 = jnp.asarray(w1)
    b1_row = jnp.asarray(b1).reshape(1, D)
    w2_row = jnp.asarray(w2).reshape(1, D)   # (D, 1) column -> (1, D) row
    b2_s = jnp.asarray(b2).reshape(1)

    out = pl.pallas_call(
        _action_score_kernel,
        out_shape=jax.ShapeDtypeStruct((num_tiles, 1, TM), jnp.float32),
        grid=(num_tiles,),
        in_specs=[
            pl.BlockSpec((TM, D), lambda i: (i, 0)),             # feats (streamed)
            pl.BlockSpec((D, D), lambda i: (0, 0)),              # w1 (resident)
            pl.BlockSpec((1, D), lambda i: (0, 0)),              # b1
            pl.BlockSpec((1, D), lambda i: (0, 0)),              # w2 row
            pl.BlockSpec(memory_space=pltpu.MemorySpace.SMEM),   # b2 scalar
        ],
        out_specs=pl.BlockSpec((1, 1, TM), lambda i: (i, 0, 0)),  # lane-dense
        compiler_params=pltpu.CompilerParams(
            dimension_semantics=("parallel",),
        ),
    )(feats, w1, b1_row, w2_row, b2_s)

    return out.reshape(n_pad)[:N]  # flatten + drop padding == squeeze(1)


def _reference(feats, w1, b1, w2, b2):
    h = feats @ w1 + b1.reshape(1, -1)
    h = jnp.where(h > 0, h, 0.01 * h)
    s = h @ w2.reshape(-1, 1) + b2.reshape(1, 1)
    return jax.nn.sigmoid(s)[:, 0]


if __name__ == "__main__":
    N, feat_dim = 16, 32
    key = jax.random.PRNGKey(0)
    k_x, k_w1, k_b1, k_w2, k_b2 = jax.random.split(key, 5)

    feats = jax.random.normal(k_x, (N, feat_dim), dtype=jnp.float32)

    # Deterministic parameter init (PyTorch Linear-style uniform bounds),
    # stored as (in_dim, out_dim) for row-major matmul in the kernel.
    bound1 = 1.0 / (feat_dim ** 0.5)
    w1 = jax.random.uniform(k_w1, (feat_dim, feat_dim), jnp.float32, -bound1, bound1)
    b1 = jax.random.uniform(k_b1, (feat_dim,), jnp.float32, -bound1, bound1)
    w2 = jax.random.uniform(k_w2, (feat_dim, 1), jnp.float32, -bound1, bound1)
    b2 = jax.random.uniform(k_b2, (1,), jnp.float32, -bound1, bound1)

    out = action_score(feats, w1, b1, w2, b2)
    out = jax.block_until_ready(out)

    ref = _reference(feats, w1, b1, w2, b2)
    assert out.shape == (N,), out.shape
    assert jnp.allclose(out, ref, atol=1e-5, rtol=1e-5), float(
        jnp.max(jnp.abs(out - ref))
    )

    print("KERNEL_OK")
</pallas_src>

<mosaic_0001>
module attributes {stable_mosaic.version = 11 : i64} {
  func.func @_action_score_kernel(%arg0: i32, %arg1: memref<256x32xf32, #tpu.memory_space<vmem>>, %arg2: memref<32x32xf32, #tpu.memory_space<vmem>>, %arg3: memref<1x32xf32, #tpu.memory_space<vmem>>, %arg4: memref<1x32xf32, #tpu.memory_space<vmem>>, %arg5: memref<1xf32, #tpu.memory_space<smem>>, %arg6: memref<1x1x256xf32, #tpu.memory_space<vmem>>) attributes {dimension_semantics = [#tpu.dimension_semantics<parallel>], iteration_bounds = array<i64: 1>, scalar_prefetch = 0 : i64, scratch_operands = 0 : i64, tpu.core_type = #tpu.core_type<tc>, window_params = [{transform_indices = @transform_0, window_bounds = array<i64: 256, 32>}, {pipeline_mode = #tpu.pipeline_mode<synchronous>, transform_indices = @transform_1, window_bounds = array<i64: 32, 32>}, {pipeline_mode = #tpu.pipeline_mode<synchronous>, transform_indices = @transform_2, window_bounds = array<i64: 1, 32>}, {pipeline_mode = #tpu.pipeline_mode<synchronous>, transform_indices = @transform_3, window_bounds = array<i64: 1, 32>}, {transform_indices = @transform_4, window_bounds = array<i64: 1>}, {transform_indices = @transform_5, window_bounds = array<i64: 1, 1, 256>}]} {
    %c0 = arith.constant 0 : index
    %c0_0 = arith.constant 0 : index
    %0 = vector.load %arg1[%c0, %c0_0] : memref<256x32xf32, #tpu.memory_space<vmem>>, vector<256x32xf32>
    %c0_1 = arith.constant 0 : index
    %c0_2 = arith.constant 0 : index
    %1 = vector.load %arg2[%c0_1, %c0_2] : memref<32x32xf32, #tpu.memory_space<vmem>>, vector<32x32xf32>
    %cst = arith.constant dense<0.000000e+00> : vector<256x32xf32>
    %2 = tpu.matmul %0, %1, %cst {dimension_numbers = #tpu.dot_dimension_numbers<[1], [0], [0], [1], [0, 0, 1, 1], [], []>} : vector<256x32xf32>, vector<32x32xf32>, vector<256x32xf32> -> vector<256x32xf32>
    %c0_3 = arith.constant 0 : index
    %c0_4 = arith.constant 0 : index
    %3 = vector.load %arg3[%c0_3, %c0_4] : memref<1x32xf32, #tpu.memory_space<vmem>>, vector<1x32xf32>
    %4 = vector.broadcast %3 : vector<1x32xf32> to vector<256x32xf32>
    %5 = arith.addf %2, %4 : vector<256x32xf32>
    %cst_5 = arith.constant 0.000000e+00 : f32
    %6 = vector.broadcast %cst_5 : f32 to vector<256x32xf32>
    %7 = arith.cmpf ogt, %5, %6 : vector<256x32xf32>
    %cst_6 = arith.constant 0.00999999977 : f32
    %8 = vector.broadcast %cst_6 : f32 to vector<256x32xf32>
    %9 = arith.mulf %8, %5 : vector<256x32xf32>
    %10 = arith.select %7, %5, %9 : vector<256x32xi1>, vector<256x32xf32>
    %c0_7 = arith.constant 0 : index
    %c0_8 = arith.constant 0 : index
    %11 = vector.load %arg4[%c0_7, %c0_8] : memref<1x32xf32, #tpu.memory_space<vmem>>, vector<1x32xf32>
    %12 = vector.broadcast %11 : vector<1x32xf32> to vector<256x32xf32>
    %13 = arith.mulf %10, %12 : vector<256x32xf32>
    %cst_9 = arith.constant dense<0.000000e+00> : vector<256xf32>
    %14 = vector.multi_reduction <add>, %13, %cst_9 [1] : vector<256x32xf32> to vector<256xf32>
    %c0_10 = arith.constant 0 : index
    %15 = memref.load %arg5[%c0_10] : memref<1xf32, #tpu.memory_space<smem>>
    %16 = vector.broadcast %15 : f32 to vector<256xf32>
    %17 = arith.addf %14, %16 : vector<256xf32>
    %18 = arith.negf %17 : vector<256xf32>
    %19 = math.exp %18 : vector<256xf32>
    %cst_11 = arith.constant 1.000000e+00 : f32
    %20 = vector.broadcast %cst_11 : f32 to vector<256xf32>
    %21 = arith.addf %20, %19 : vector<256xf32>
    %22 = arith.divf %20, %21 : vector<256xf32>
    %23 = vector.shape_cast %22 : vector<256xf32> to vector<1x1x256xf32>
    %c0_12 = arith.constant 0 : index
    %c0_13 = arith.constant 0 : index
    %c0_14 = arith.constant 0 : index
    %24 = vector.load %arg6[%c0_12, %c0_13, %c0_14] : memref<1x1x256xf32, #tpu.memory_space<vmem>>, vector<1x1x256xf32>
    tpu.vector_store %arg6[%c0_12, %c0_13, %c0_14], %23 {strides = array<i32>} : memref<1x1x256xf32, #tpu.memory_space<vmem>>, vector<1x1x256xf32>,
    return
  }
  func.func @transform_0(%arg0: i32) -> (i32, i32) {
    %c0_i32 = arith.constant 0 : i32
    %c0_i32_0 = arith.constant 0 : i32
    return %arg0, %c0_i32 : i32, i32
  }
  func.func @transform_1(%arg0: i32) -> (i32, i32) {
    %c0_i32 = arith.constant 0 : i32
    %c0_i32_0 = arith.constant 0 : i32
    %c0_i32_1 = arith.constant 0 : i32
    return %c0_i32, %c0_i32_0 : i32, i32
  }
  func.func @transform_2(%arg0: i32) -> (i32, i32) {
    %c0_i32 = arith.constant 0 : i32
    %c0_i32_0 = arith.constant 0 : i32
    %c0_i32_1 = arith.constant 0 : i32
    return %c0_i32, %c0_i32_0 : i32, i32
  }
  func.func @transform_3(%arg0: i32) -> (i32, i32) {
    %c0_i32 = arith.constant 0 : i32
    %c0_i32_0 = arith.constant 0 : i32
    %c0_i32_1 = arith.constant 0 : i32
    return %c0_i32, %c0_i32_0 : i32, i32
  }
  func.func @transform_4(%arg0: i32) -> i32 {
    %c0_i32 = arith.constant 0 : i32
    %c0_i32_0 = arith.constant 0 : i32
    return %c0_i32 : i32
  }
  func.func @transform_5(%arg0: i32) -> (i32, i32, i32) {
    %c0_i32 = arith.constant 0 : i32
    %c0_i32_0 = arith.constant 0 : i32
    %c0_i32_1 = arith.constant 0 : i32
    return %arg0, %c0_i32, %c0_i32_0 : i32, i32, i32
  }
}

</mosaic_0001>

<llo_original>
// kernel: tpu_custom_call.1
$region0: #{tpu_custom_call.1}
  #allocation0 [shape = 'u32[]', space=smem, size = 0x4, offset = 0x4, fixed_abs, tag = 'smem constant byte address 0x4 - core index']
  #allocation1 [shape = 'u32[72,128]{1,0:T(1,128)}', space=vmem, size = 0x9000, scoped, tag = 'internal scratch']
  #allocation2 [shape = 'f32[1]{0:T(128)S(6)}', space=smem, size = 0x200, scoped, tag = 'scoped memory for tpu_custom_call.1']
  %s0 = inlined_call_operand.vmem [shape: f32[256,32], index: 0, kind: input, shape index: {}]
  %s1 = inlined_call_operand.vmem [shape: f32[32,32], index: 1, kind: input, shape index: {}]
  %s2 = inlined_call_operand.vmem [shape: f32[1,32], index: 2, kind: input, shape index: {}]
  %s3 = inlined_call_operand.vmem [shape: f32[1,32], index: 3, kind: input, shape index: {}]
  %s4 = inlined_call_operand.<no memory space> [shape: f32[1], index: 4, kind: input, shape index: {}]
  %s5 = inlined_call_operand.hbm [shape: f32[1,1,256], index: 5, kind: output, shape index: {}]
  %s6 = sld [smem:[#allocation0]]
  $region30: #{tpu_custom_call.1} parent=0
    _
  %s8 = ssub.s32 1, %s6
  %s9 = scalar_select 0, %s8, %s6
  %10 = sst [smem:[#allocation2]] %s4
  $region1: #{tpu_custom_call.1} parent=0
    #allocation3 [shape = 'u8[1024]{0}', space=vmem, size = 0x400, scoped, tag = 'output window, operand 0, single buffered']
    #allocation4 [shape = 's32[1]{0}', space=sflag, size = 0x4, scoped, tag = 'scoped memory for tpu_custom_call.1']
    %11 = vsyncpa [#allocation4], 0
    // Predicated region
    $region2: #{tpu_custom_call.1} parent=1 // pred_check
      _
    $region3: #{tpu_custom_call.1} parent=1 // pred_check_branch
      %13 = sbr.rel (0) target = $region5
    $region4: #{tpu_custom_call.1} parent=1 // pred_region
      _
    $region5: #{tpu_custom_call.1} parent=1 // pred_fallthru
      _
    // Predicated region
    $region6: #{tpu_custom_call.1} parent=1 // pred_check
      _
    $region7: #{tpu_custom_call.1} parent=1 // pred_check_branch
      %15 = sbr.rel (0) target = $region9
    $region8: #{tpu_custom_call.1} parent=1 // pred_region
      _
    $region9: #{tpu_custom_call.1} parent=1 // pred_fallthru
      _
    // Predicated region
    $region10: #{tpu_custom_call.1} parent=1 // pred_check
      _
    $region11: #{tpu_custom_call.1} parent=1 // pred_check_branch
      %17 = sbr.rel (0) target = $region13
    $region12: #{tpu_custom_call.1} parent=1 // pred_region
      _
    $region13: #{tpu_custom_call.1} parent=1 // pred_fallthru
      _
    // Predicated region
    $region14: #{tpu_custom_call.1} parent=1 // pred_check
      _
    $region15: #{tpu_custom_call.1} parent=1 // pred_check_branch
      %19 = sbr.rel (0) target = $region17
    $region16: #{tpu_custom_call.1} parent=1 // pred_region
      _
    $region17: #{tpu_custom_call.1} parent=1 // pred_fallthru
      _
    // Predicated region
    $region18: #{tpu_custom_call.1} parent=1 // pred_check
      _
    $region19: #{tpu_custom_call.1} parent=1 // pred_check_branch
      %21 = sbr.rel (0) target = $region21
    $region20: #{tpu_custom_call.1} parent=1 // pred_region
      _
    $region21: #{tpu_custom_call.1} parent=1 // pred_fallthru
      _
    %v22 = vld [vmem:[%s0] sm:$0xff]
    %v23 = vld [vmem:[%s0 + $0x8] sm:$0xff]
    %v24 = vld [vmem:[%s0 + $0x10] sm:$0xff]
    %v25 = vld [vmem:[%s0 + $0x18] sm:$0xff]
    %v26 = vld [vmem:[%s0 + $0x20] sm:$0xff]
    %v27 = vld [vmem:[%s0 + $0x28] sm:$0xff]
    %v28 = vld [vmem:[%s0 + $0x30] sm:$0xff]
    %v29 = vld [vmem:[%s0 + $0x38] sm:$0xff]
    %v30 = vld [vmem:[%s0 + $0x40] sm:$0xff]
    %v31 = vld [vmem:[%s0 + $0x48] sm:$0xff]
    %v32 = vld [vmem:[%s0 + $0x50] sm:$0xff]
    %v33 = vld [vmem:[%s0 + $0x58] sm:$0xff]
    %v34 = vld [vmem:[%s0 + $0x60] sm:$0xff]
    %v35 = vld [vmem:[%s0 + $0x68] sm:$0xff]
    %v36 = vld [vmem:[%s0 + $0x70] sm:$0xff]
    %v37 = vld [vmem:[%s0 + $0x78] sm:$0xff]
    %v38 = vld [vmem:[%s0 + $0x80] sm:$0xff]
    %v39 = vld [vmem:[%s0 + $0x88] sm:$0xff]
    %v40 = vld [vmem:[%s0 + $0x90] sm:$0xff]
    %v41 = vld [vmem:[%s0 + $0x98] sm:$0xff]
    %v42 = vld [vmem:[%s0 + $0xa0] sm:$0xff]
    %v43 = vld [vmem:[%s0 + $0xa8] sm:$0xff]
    %v44 = vld [vmem:[%s0 + $0xb0] sm:$0xff]
    %v45 = vld [vmem:[%s0 + $0xb8] sm:$0xff]
    %v46 = vld [vmem:[%s0 + $0xc0] sm:$0xff]
    %v47 = vld [vmem:[%s0 + $0xc8] sm:$0xff]
    %v48 = vld [vmem:[%s0 + $0xd0] sm:$0xff]
    %v49 = vld [vmem:[%s0 + $0xd8] sm:$0xff]
    %v50 = vld [vmem:[%s0 + $0xe0] sm:$0xff]
    %v51 = vld [vmem:[%s0 + $0xe8] sm:$0xff]
    %v52 = vld [vmem:[%s0 + $0xf0] sm:$0xff]
    %v53 = vld [vmem:[%s0 + $0xf8] sm:$0xff]
    %v54 = vld [vmem:[%s1] sm:$0xff]
    %v55 = vld [vmem:[%s1 + $0x8] sm:$0xff]
    %v56 = vld [vmem:[%s1 + $0x10] sm:$0xff]
    %v57 = vld [vmem:[%s1 + $0x18] sm:$0xff]
    %v58 = vld [vmem:[%s2] sm:$0x1]
    %v60 = vperm.slane %v58, 0
    %vm62 = vcmask 261120
    %v64 = vsel %vm62, %v22, 0
    %v67 = vsel %vm62, %v23, 0
    %v70 = vsel %vm62, %v24, 0
    %v73 = vsel %vm62, %v25, 0
    %v76 = vsel %vm62, %v26, 0
    %v79 = vsel %vm62, %v27, 0
    %v82 = vsel %vm62, %v28, 0
    %v85 = vsel %vm62, %v29, 0
    %v88 = vsel %vm62, %v30, 0
    %v91 = vsel %vm62, %v31, 0
    %v94 = vsel %vm62, %v32, 0
    %v97 = vsel %vm62, %v33, 0
    %v100 = vsel %vm62, %v34, 0
    %v103 = vsel %vm62, %v35, 0
    %v106 = vsel %vm62, %v36, 0
    %v109 = vsel %vm62, %v37, 0
    %v112 = vsel %vm62, %v38, 0
    %v115 = vsel %vm62, %v39, 0
    %v118 = vsel %vm62, %v40, 0
    %v121 = vsel %vm62, %v41, 0
    %v124 = vsel %vm62, %v42, 0
    %v127 = vsel %vm62, %v43, 0
    %v130 = vsel %vm62, %v44, 0
    %v133 = vsel %vm62, %v45, 0
    %v136 = vsel %vm62, %v46, 0
    %v139 = vsel %vm62, %v47, 0
    %v142 = vsel %vm62, %v48, 0
    %v145 = vsel %vm62, %v49, 0
    %v148 = vsel %vm62, %v50, 0
    %v151 = vsel %vm62, %v51, 0
    %v154 = vsel %vm62, %v52, 0
    %v157 = vsel %vm62, %v53, 0
    %159 = vmatpush.msra.mxu0 0.0
    %160 = vmatpush.msra.mxu0 0.0
    %161 = vmatpush.msra.mxu0 0.0
    %162 = vmatpush.msra.mxu0 0.0
    %163 = vmatpush.msra.mxu0 0.0
    %164 = vmatpush.msra.mxu0 0.0
    %165 = vmatpush.msra.mxu0 0.0
    %166 = vmatpush.msra.mxu0 0.0
    %167 = vmatpush.msra.mxu0 0.0
    %168 = vmatpush.msra.mxu0 0.0
    %169 = vmatpush.msra.mxu0 0.0
    %170 = vmatpush.msra.mxu0 0.0
    %171 = vmatpush.msra.mxu0 %v57
    %172 = vmatpush.msra.mxu0 %v56
    %173 = vmatpush.msra.mxu0 %v55
    %174 = vmatpush.msra.mxu0 %v54
    %175 = vmatmul.f32.gmra.mxu0 %v64
    %v176 = vpop.f32.mrf.mxu0
    %v177 = vadd.f32 %v60, %v176
    %178 = vmatmul.f32.gmra.mxu0 %v67
    %v179 = vpop.f32.mrf.mxu0
    %v180 = vadd.f32 %v60, %v179
    %181 = vmatmul.f32.gmra.mxu0 %v70
    %v182 = vpop.f32.mrf.mxu0
    %v183 = vadd.f32 %v60, %v182
    %184 = vmatmul.f32.gmra.mxu0 %v73
    %v185 = vpop.f32.mrf.mxu0
    %v186 = vadd.f32 %v60, %v185
    %187 = vmatmul.f32.gmra.mxu0 %v76
    %v188 = vpop.f32.mrf.mxu0
    %v189 = vadd.f32 %v60, %v188
    %190 = vmatmul.f32.gmra.mxu0 %v79
    %v191 = vpop.f32.mrf.mxu0
    %v192 = vadd.f32 %v60, %v191
    %193 = vmatmul.f32.gmra.mxu0 %v82
    %v194 = vpop.f32.mrf.mxu0
    %v195 = vadd.f32 %v60, %v194
    %196 = vmatmul.f32.gmra.mxu0 %v85
    %v197 = vpop.f32.mrf.mxu0
    %v198 = vadd.f32 %v60, %v197
    %199 = vmatmul.f32.gmra.mxu0 %v88
    %v200 = vpop.f32.mrf.mxu0
    %v201 = vadd.f32 %v60, %v200
    %202 = vmatmul.f32.gmra.mxu0 %v91
    %v203 = vpop.f32.mrf.mxu0
    %v204 = vadd.f32 %v60, %v203
    %205 = vmatmul.f32.gmra.mxu0 %v94
    %v206 = vpop.f32.mrf.mxu0
    %v207 = vadd.f32 %v60, %v206
    %208 = vmatmul.f32.gmra.mxu0 %v97
    %v209 = vpop.f32.mrf.mxu0
    %v210 = vadd.f32 %v60, %v209
    %211 = vmatmul.f32.gmra.mxu0 %v100
    %v212 = vpop.f32.mrf.mxu0
    %v213 = vadd.f32 %v60, %v212
    %214 = vmatmul.f32.gmra.mxu0 %v103
    %v215 = vpop.f32.mrf.mxu0
    %v216 = vadd.f32 %v60, %v215
    %217 = vmatmul.f32.gmra.mxu0 %v106
    %v218 = vpop.f32.mrf.mxu0
    %v219 = vadd.f32 %v60, %v218
    %220 = vmatmul.f32.gmra.mxu0 %v109
    %v221 = vpop.f32.mrf.mxu0
    %v222 = vadd.f32 %v60, %v221
    %223 = vmatmul.f32.gmra.mxu0 %v112
    %v224 = vpop.f32.mrf.mxu0
    %v225 = vadd.f32 %v60, %v224
    %226 = vmatmul.f32.gmra.mxu0 %v115
    %v227 = vpop.f32.mrf.mxu0
    %v228 = vadd.f32 %v60, %v227
    %229 = vmatmul.f32.gmra.mxu0 %v118
    %v230 = vpop.f32.mrf.mxu0
    %v231 = vadd.f32 %v60, %v230
    %232 = vmatmul.f32.gmra.mxu0 %v121
    %v233 = vpop.f32.mrf.mxu0
    %v234 = vadd.f32 %v60, %v233
    %235 = vmatmul.f32.gmra.mxu0 %v124
    %v236 = vpop.f32.mrf.mxu0
    %v237 = vadd.f32 %v60, %v236
    %238 = vmatmul.f32.gmra.mxu0 %v127
    %v239 = vpop.f32.mrf.mxu0
    %v240 = vadd.f32 %v60, %v239
    %241 = vmatmul.f32.gmra.mxu0 %v130
    %v242 = vpop.f32.mrf.mxu0
    %v243 = vadd.f32 %v60, %v242
    %244 = vmatmul.f32.gmra.mxu0 %v133
    %v245 = vpop.f32.mrf.mxu0
    %v246 = vadd.f32 %v60, %v245
    %247 = vmatmul.f32.gmra.mxu0 %v136
    %v248 = vpop.f32.mrf.mxu0
    %v249 = vadd.f32 %v60, %v248
    %250 = vmatmul.f32.gmra.mxu0 %v139
    %v251 = vpop.f32.mrf.mxu0
    %v252 = vadd.f32 %v60, %v251
    %253 = vmatmul.f32.gmra.mxu0 %v142
    %v254 = vpop.f32.mrf.mxu0
    %v255 = vadd.f32 %v60, %v254
    %256 = vmatmul.f32.gmra.mxu0 %v145
    %v257 = vpop.f32.mrf.mxu0
    %v258 = vadd.f32 %v60, %v257
    %259 = vmatmul.f32.gmra.mxu0 %v148
    %v260 = vpop.f32.mrf.mxu0
    %v261 = vadd.f32 %v60, %v260
    %262 = vmatmul.f32.gmra.mxu0 %v151
    %v263 = vpop.f32.mrf.mxu0
    %v264 = vadd.f32 %v60, %v263
    %265 = vmatmul.f32.gmra.mxu0 %v154
    %v266 = vpop.f32.mrf.mxu0
    %v267 = vadd.f32 %v60, %v266
    %268 = vmatmul.f32.gmra.mxu0 %v157
    %v269 = vpop.f32.mrf.mxu0
    %v270 = vadd.f32 %v60, %v269
    %271 = vdwg.mxu0
    %vm272 = vcmp.gt.f32.partialorder %v177, 0.0
    %vm273 = vcmp.gt.f32.partialorder %v180, 0.0
    %vm274 = vcmp.gt.f32.partialorder %v183, 0.0
    %vm275 = vcmp.gt.f32.partialorder %v186, 0.0
    %vm276 = vcmp.gt.f32.partialorder %v189, 0.0
    %vm277 = vcmp.gt.f32.partialorder %v192, 0.0
    %vm278 = vcmp.gt.f32.partialorder %v195, 0.0
    %vm279 = vcmp.gt.f32.partialorder %v198, 0.0
    %vm280 = vcmp.gt.f32.partialorder %v201, 0.0
    %vm281 = vcmp.gt.f32.partialorder %v204, 0.0
    %vm282 = vcmp.gt.f32.partialorder %v207, 0.0
    %vm283 = vcmp.gt.f32.partialorder %v210, 0.0
    %vm284 = vcmp.gt.f32.partialorder %v213, 0.0
    %vm285 = vcmp.gt.f32.partialorder %v216, 0.0
    %vm286 = vcmp.gt.f32.partialorder %v219, 0.0
    %vm287 = vcmp.gt.f32.partialorder %v222, 0.0
    %vm288 = vcmp.gt.f32.partialorder %v225, 0.0
    %vm289 = vcmp.gt.f32.partialorder %v228, 0.0
    %vm290 = vcmp.gt.f32.partialorder %v231, 0.0
    %vm291 = vcmp.gt.f32.partialorder %v234, 0.0
    %vm292 = vcmp.gt.f32.partialorder %v237, 0.0
    %vm293 = vcmp.gt.f32.partialorder %v240, 0.0
    %vm294 = vcmp.gt.f32.partialorder %v243, 0.0
    %vm295 = vcmp.gt.f32.partialorder %v246, 0.0
    %vm296 = vcmp.gt.f32.partialorder %v249, 0.0
    %vm297 = vcmp.gt.f32.partialorder %v252, 0.0
    %vm298 = vcmp.gt.f32.partialorder %v255, 0.0
    %vm299 = vcmp.gt.f32.partialorder %v258, 0.0
    %vm300 = vcmp.gt.f32.partialorder %v261, 0.0
    %vm301 = vcmp.gt.f32.partialorder %v264, 0.0
    %vm302 = vcmp.gt.f32.partialorder %v267, 0.0
    %vm303 = vcmp.gt.f32.partialorder %v270, 0.0
    %v304 = vmul.f32 %v177, 0.01
    %v305 = vmul.f32 %v180, 0.01
    %v306 = vmul.f32 %v183, 0.01
    %v307 = vmul.f32 %v186, 0.01
    %v308 = vmul.f32 %v189, 0.01
    %v309 = vmul.f32 %v192, 0.01
    %v310 = vmul.f32 %v195, 0.01
    %v311 = vmul.f32 %v198, 0.01
    %v312 = vmul.f32 %v201, 0.01
    %v313 = vmul.f32 %v204, 0.01
    %v314 = vmul.f32 %v207, 0.01
    %v315 = vmul.f32 %v210, 0.01
    %v316 = vmul.f32 %v213, 0.01
    %v317 = vmul.f32 %v216, 0.01
    %v318 = vmul.f32 %v219, 0.01
    %v319 = vmul.f32 %v222, 0.01
    %v320 = vmul.f32 %v225, 0.01
    %v321 = vmul.f32 %v228, 0.01
    %v322 = vmul.f32 %v231, 0.01
    %v323 = vmul.f32 %v234, 0.01
    %v324 = vmul.f32 %v237, 0.01
    %v325 = vmul.f32 %v240, 0.01
    %v326 = vmul.f32 %v243, 0.01
    %v327 = vmul.f32 %v246, 0.01
    %v328 = vmul.f32 %v249, 0.01
    %v329 = vmul.f32 %v252, 0.01
    %v330 = vmul.f32 %v255, 0.01
    %v331 = vmul.f32 %v258, 0.01
    %v332 = vmul.f32 %v261, 0.01
    %v333 = vmul.f32 %v264, 0.01
    %v334 = vmul.f32 %v267, 0.01
    %v335 = vmul.f32 %v270, 0.01
    %v336 = vsel %vm272, %v177, %v304
    %v337 = vsel %vm273, %v180, %v305
    %v338 = vsel %vm274, %v183, %v306
    %v339 = vsel %vm275, %v186, %v307
    %v340 = vsel %vm276, %v189, %v308
    %v341 = vsel %vm277, %v192, %v309
    %v342 = vsel %vm278, %v195, %v310
    %v343 = vsel %vm279, %v198, %v311
    %v344 = vsel %vm280, %v201, %v312
    %v345 = vsel %vm281, %v204, %v313
    %v346 = vsel %vm282, %v207, %v314
    %v347 = vsel %vm283, %v210, %v315
    %v348 = vsel %vm284, %v213, %v316
    %v349 = vsel %vm285, %v216, %v317
    %v350 = vsel %vm286, %v219, %v318
    %v351 = vsel %vm287, %v222, %v319
    %v352 = vsel %vm288, %v225, %v320
    %v353 = vsel %vm289, %v228, %v321
    %v354 = vsel %vm290, %v231, %v322
    %v355 = vsel %vm291, %v234, %v323
    %v356 = vsel %vm292, %v237, %v324
    %v357 = vsel %vm293, %v240, %v325
    %v358 = vsel %vm294, %v243, %v326
    %v359 = vsel %vm295, %v246, %v327
    %v360 = vsel %vm296, %v249, %v328
    %v361 = vsel %vm297, %v252, %v329
    %v362 = vsel %vm298, %v255, %v330
    %v363 = vsel %vm299, %v258, %v331
    %v364 = vsel %vm300, %v261, %v332
    %v365 = vsel %vm301, %v264, %v333
    %v366 = vsel %vm302, %v267, %v334
    %v367 = vsel %vm303, %v270, %v335
    %v368 = vld [vmem:[%s3] sm:$0x1]
    %v370 = vperm.slane %v368, 0
    %v372 = vmul.f32 %v336, %v370
    %v373 = vmul.f32 %v337, %v370
    %v374 = vmul.f32 %v338, %v370
    %v375 = vmul.f32 %v339, %v370
    %v376 = vmul.f32 %v340, %v370
    %v377 = vmul.f32 %v341, %v370
    %v378 = vmul.f32 %v342, %v370
    %v379 = vmul.f32 %v343, %v370
    %v380 = vmul.f32 %v344, %v370
    %v381 = vmul.f32 %v345, %v370
    %v382 = vmul.f32 %v346, %v370
    %v383 = vmul.f32 %v347, %v370
    %v384 = vmul.f32 %v348, %v370
    %v385 = vmul.f32 %v349, %v370
    %v386 = vmul.f32 %v350, %v370
    %v387 = vmul.f32 %v351, %v370
    %v388 = vmul.f32 %v352, %v370
    %v389 = vmul.f32 %v353, %v370
    %v390 = vmul.f32 %v354, %v370
    %v391 = vmul.f32 %v355, %v370
    %v392 = vmul.f32 %v356, %v370
    %v393 = vmul.f32 %v357, %v370
    %v394 = vmul.f32 %v358, %v370
    %v395 = vmul.f32 %v359, %v370
    %v396 = vmul.f32 %v360, %v370
    %v397 = vmul.f32 %v361, %v370
    %v398 = vmul.f32 %v362, %v370
    %v399 = vmul.f32 %v363, %v370
    %v400 = vmul.f32 %v364, %v370
    %v401 = vmul.f32 %v365, %v370
    %v402 = vmul.f32 %v366, %v370
    %v403 = vmul.f32 %v367, %v370
    %v404 = vsel %vm62, %v372, 0.0
    %405 = vadd.xlane.f32.xlu0 %v404
    %v406 = vpop.xlane.xlu0 %405
    %v407 = vsel %vm62, %v373, 0.0
    %408 = vadd.xlane.f32.xlu0 %v407
    %v409 = vpop.xlane.xlu0 %408
    %v410 = vsel %vm62, %v374, 0.0
    %411 = vadd.xlane.f32.xlu0 %v410
    %v412 = vpop.xlane.xlu0 %411
    %v413 = vsel %vm62, %v375, 0.0
    %414 = vadd.xlane.f32.xlu0 %v413
    %v415 = vpop.xlane.xlu0 %414
    %v416 = vsel %vm62, %v376, 0.0
    %417 = vadd.xlane.f32.xlu0 %v416
    %v418 = vpop.xlane.xlu0 %417
    %v419 = vsel %vm62, %v377, 0.0
    %420 = vadd.xlane.f32.xlu0 %v419
    %v421 = vpop.xlane.xlu0 %420
    %v422 = vsel %vm62, %v378, 0.0
    %423 = vadd.xlane.f32.xlu0 %v422
    %v424 = vpop.xlane.xlu0 %423
    %v425 = vsel %vm62, %v379, 0.0
    %426 = vadd.xlane.f32.xlu0 %v425
    %v427 = vpop.xlane.xlu0 %426
    %v428 = vsel %vm62, %v380, 0.0
    %429 = vadd.xlane.f32.xlu0 %v428
    %v430 = vpop.xlane.xlu0 %429
    %v431 = vsel %vm62, %v381, 0.0
    %432 = vadd.xlane.f32.xlu0 %v431
    %v433 = vpop.xlane.xlu0 %432
    %v434 = vsel %vm62, %v382, 0.0
    %435 = vadd.xlane.f32.xlu0 %v434
    %v436 = vpop.xlane.xlu0 %435
    %v437 = vsel %vm62, %v383, 0.0
    %438 = vadd.xlane.f32.xlu0 %v437
    %v439 = vpop.xlane.xlu0 %438
    %v440 = vsel %vm62, %v384, 0.0
    %441 = vadd.xlane.f32.xlu0 %v440
    %v442 = vpop.xlane.xlu0 %441
    %v443 = vsel %vm62, %v385, 0.0
    %444 = vadd.xlane.f32.xlu0 %v443
    %v445 = vpop.xlane.xlu0 %444
    %v446 = vsel %vm62, %v386, 0.0
    %447 = vadd.xlane.f32.xlu0 %v446
    %v448 = vpop.xlane.xlu0 %447
    %v449 = vsel %vm62, %v387, 0.0
    %450 = vadd.xlane.f32.xlu0 %v449
    %v451 = vpop.xlane.xlu0 %450
    %v452 = vsel %vm62, %v388, 0.0
    %453 = vadd.xlane.f32.xlu0 %v452
    %v454 = vpop.xlane.xlu0 %453
    %v455 = vsel %vm62, %v389, 0.0
    %456 = vadd.xlane.f32.xlu0 %v455
    %v457 = vpop.xlane.xlu0 %456
    %v458 = vsel %vm62, %v390, 0.0
    %459 = vadd.xlane.f32.xlu0 %v458
    %v460 = vpop.xlane.xlu0 %459
    %v461 = vsel %vm62, %v391, 0.0
    %462 = vadd.xlane.f32.xlu0 %v461
    %v463 = vpop.xlane.xlu0 %462
    %v464 = vsel %vm62, %v392, 0.0
    %465 = vadd.xlane.f32.xlu0 %v464
    %v466 = vpop.xlane.xlu0 %465
    %v467 = vsel %vm62, %v393, 0.0
    %468 = vadd.xlane.f32.xlu0 %v467
    %v469 = vpop.xlane.xlu0 %468
    %v470 = vsel %vm62, %v394, 0.0
    %471 = vadd.xlane.f32.xlu0 %v470
    %v472 = vpop.xlane.xlu0 %471
    %v473 = vsel %vm62, %v395, 0.0
    %474 = vadd.xlane.f32.xlu0 %v473
    %v475 = vpop.xlane.xlu0 %474
    %v476 = vsel %vm62, %v396, 0.0
    %477 = vadd.xlane.f32.xlu0 %v476
    %v478 = vpop.xlane.xlu0 %477
    %v479 = vsel %vm62, %v397, 0.0
    %480 = vadd.xlane.f32.xlu0 %v479
    %v481 = vpop.xlane.xlu0 %480
    %v482 = vsel %vm62, %v398, 0.0
    %483 = vadd.xlane.f32.xlu0 %v482
    %v484 = vpop.xlane.xlu0 %483
    %v485 = vsel %vm62, %v399, 0.0
    %486 = vadd.xlane.f32.xlu0 %v485
    %v487 = vpop.xlane.xlu0 %486
    %v488 = vsel %vm62, %v400, 0.0
    %489 = vadd.xlane.f32.xlu0 %v488
    %v490 = vpop.xlane.xlu0 %489
    %v491 = vsel %vm62, %v401, 0.0
    %492 = vadd.xlane.f32.xlu0 %v491
    %v493 = vpop.xlane.xlu0 %492
    %v494 = vsel %vm62, %v402, 0.0
    %495 = vadd.xlane.f32.xlu0 %v494
    %v496 = vpop.xlane.xlu0 %495
    %v497 = vsel %vm62, %v403, 0.0
    %498 = vadd.xlane.f32.xlu0 %v497
    %v499 = vpop.xlane.xlu0 %498
    %s500 = sld [smem:[#allocation2]]
    %v501 = vstv %s500
    %v502 = vadd.f32 %v406, %v501
    %v503 = vadd.f32 %v409, %v501
    %v504 = vadd.f32 %v412, %v501
    %v505 = vadd.f32 %v415, %v501
    %v506 = vadd.f32 %v418, %v501
    %v507 = vadd.f32 %v421, %v501
    %v508 = vadd.f32 %v424, %v501
    %v509 = vadd.f32 %v427, %v501
    %v510 = vadd.f32 %v430, %v501
    %v511 = vadd.f32 %v433, %v501
    %v512 = vadd.f32 %v436, %v501
    %v513 = vadd.f32 %v439, %v501
    %v514 = vadd.f32 %v442, %v501
    %v515 = vadd.f32 %v445, %v501
    %v516 = vadd.f32 %v448, %v501
    %v517 = vadd.f32 %v451, %v501
    %v518 = vadd.f32 %v454, %v501
    %v519 = vadd.f32 %v457, %v501
    %v520 = vadd.f32 %v460, %v501
    %v521 = vadd.f32 %v463, %v501
    %v522 = vadd.f32 %v466, %v501
    %v523 = vadd.f32 %v469, %v501
    %v524 = vadd.f32 %v472, %v501
    %v525 = vadd.f32 %v475, %v501
    %v526 = vadd.f32 %v478, %v501
    %v527 = vadd.f32 %v481, %v501
    %v528 = vadd.f32 %v484, %v501
    %v529 = vadd.f32 %v487, %v501
    %v530 = vadd.f32 %v490, %v501
    %v531 = vadd.f32 %v493, %v501
    %v532 = vadd.f32 %v496, %v501
    %v533 = vadd.f32 %v499, %v501
    %v534 = vxor.u32 %v502, 2147483648
    %v535 = vxor.u32 %v503, 2147483648
    %v536 = vxor.u32 %v504, 2147483648
    %v537 = vxor.u32 %v505, 2147483648
    %v538 = vxor.u32 %v506, 2147483648
    %v539 = vxor.u32 %v507, 2147483648
    %v540 = vxor.u32 %v508, 2147483648
    %v541 = vxor.u32 %v509, 2147483648
    %v542 = vxor.u32 %v510, 2147483648
    %v543 = vxor.u32 %v511, 2147483648
    %v544 = vxor.u32 %v512, 2147483648
    %v545 = vxor.u32 %v513, 2147483648
    %v546 = vxor.u32 %v514, 2147483648
    %v547 = vxor.u32 %v515, 2147483648
    %v548 = vxor.u32 %v516, 2147483648
    %v549 = vxor.u32 %v517, 2147483648
    %v550 = vxor.u32 %v518, 2147483648
    %v551 = vxor.u32 %v519, 2147483648
    %v552 = vxor.u32 %v520, 2147483648
    %v553 = vxor.u32 %v521, 2147483648
    %v554 = vxor.u32 %v522, 2147483648
    %v555 = vxor.u32 %v523, 2147483648
    %v556 = vxor.u32 %v524, 2147483648
    %v557 = vxor.u32 %v525, 2147483648
    %v558 = vxor.u32 %v526, 2147483648
    %v559 = vxor.u32 %v527, 2147483648
    %v560 = vxor.u32 %v528, 2147483648
    %v561 = vxor.u32 %v529, 2147483648
    %v562 = vxor.u32 %v530, 2147483648
    %v563 = vxor.u32 %v531, 2147483648
    %v564 = vxor.u32 %v532, 2147483648
    %v565 = vxor.u32 %v533, 2147483648
    %v566 = vmul.f32 %v534, 1.442695
    %v567 = vpow.pop %v566
    %v568 = vmul.f32 %v535, 1.442695
    %v569 = vpow.pop %v568
    %v570 = vmul.f32 %v536, 1.442695
    %v571 = vpow.pop %v570
    %v572 = vmul.f32 %v537, 1.442695
    %v573 = vpow.pop %v572
    %v574 = vmul.f32 %v538, 1.442695
    %v575 = vpow.pop %v574
    %v576 = vmul.f32 %v539, 1.442695
    %v577 = vpow.pop %v576
    %v578 = vmul.f32 %v540, 1.442695
    %v579 = vpow.pop %v578
    %v580 = vmul.f32 %v541, 1.442695
    %v581 = vpow.pop %v580
    %v582 = vmul.f32 %v542, 1.442695
    %v583 = vpow.pop %v582
    %v584 = vmul.f32 %v543, 1.442695
    %v585 = vpow.pop %v584
    %v586 = vmul.f32 %v544, 1.442695
    %v587 = vpow.pop %v586
    %v588 = vmul.f32 %v545, 1.442695
    %v589 = vpow.pop %v588
    %v590 = vmul.f32 %v546, 1.442695
    %v591 = vpow.pop %v590
    %v592 = vmul.f32 %v547, 1.442695
    %v593 = vpow.pop %v592
    %v594 = vmul.f32 %v548, 1.442695
    %v595 = vpow.pop %v594
    %v596 = vmul.f32 %v549, 1.442695
    %v597 = vpow.pop %v596
    %v598 = vmul.f32 %v550, 1.442695
    %v599 = vpow.pop %v598
    %v600 = vmul.f32 %v551, 1.442695
    %v601 = vpow.pop %v600
    %v602 = vmul.f32 %v552, 1.442695
    %v603 = vpow.pop %v602
    %v604 = vmul.f32 %v553, 1.442695
    %v605 = vpow.pop %v604
    %v606 = vmul.f32 %v554, 1.442695
    %v607 = vpow.pop %v606
    %v608 = vmul.f32 %v555, 1.442695
    %v609 = vpow.pop %v608
    %v610 = vmul.f32 %v556, 1.442695
    %v611 = vpow.pop %v610
    %v612 = vmul.f32 %v557, 1.442695
    %v613 = vpow.pop %v612
    %v614 = vmul.f32 %v558, 1.442695
    %v615 = vpow.pop %v614
    %v616 = vmul.f32 %v559, 1.442695
    %v617 = vpow.pop %v616
    %v618 = vmul.f32 %v560, 1.442695
    %v619 = vpow.pop %v618
    %v620 = vmul.f32 %v561, 1.442695
    %v621 = vpow.pop %v620
    %v622 = vmul.f32 %v562, 1.442695
    %v623 = vpow.pop %v622
    %v624 = vmul.f32 %v563, 1.442695
    %v625 = vpow.pop %v624
    %v626 = vmul.f32 %v564, 1.442695
    %v627 = vpow.pop %v626
    %v628 = vmul.f32 %v565, 1.442695
    %v629 = vpow.pop %v628
    %v630 = vadd.f32 %v567, 1.0
    %v631 = vadd.f32 %v569, 1.0
    %v632 = vadd.f32 %v571, 1.0
    %v633 = vadd.f32 %v573, 1.0
    %v634 = vadd.f32 %v575, 1.0
    %v635 = vadd.f32 %v577, 1.0
    %v636 = vadd.f32 %v579, 1.0
    %v637 = vadd.f32 %v581, 1.0
    %v638 = vadd.f32 %v583, 1.0
    %v639 = vadd.f32 %v585, 1.0
    %v640 = vadd.f32 %v587, 1.0
    %v641 = vadd.f32 %v589, 1.0
    %v642 = vadd.f32 %v591, 1.0
    %v643 = vadd.f32 %v593, 1.0
    %v644 = vadd.f32 %v595, 1.0
    %v645 = vadd.f32 %v597, 1.0
    %v646 = vadd.f32 %v599, 1.0
    %v647 = vadd.f32 %v601, 1.0
    %v648 = vadd.f32 %v603, 1.0
    %v649 = vadd.f32 %v605, 1.0
    %v650 = vadd.f32 %v607, 1.0
    %v651 = vadd.f32 %v609, 1.0
    %v652 = vadd.f32 %v611, 1.0
    %v653 = vadd.f32 %v613, 1.0
    %v654 = vadd.f32 %v615, 1.0
    %v655 = vadd.f32 %v617, 1.0
    %v656 = vadd.f32 %v619, 1.0
    %v657 = vadd.f32 %v621, 1.0
    %v658 = vadd.f32 %v623, 1.0
    %v659 = vadd.f32 %v625, 1.0
    %v660 = vadd.f32 %v627, 1.0
    %v661 = vadd.f32 %v629, 1.0
    %v662 = vrcp.pop %v630
    %v663 = vmul.f32 %v630, %v662
    %v664 = vsub.f32 1.0, %v663
    %v665 = vmul.f32 %v662, %v664
    %v666 = vadd.f32 %v662, %v665
    %vm667 = vweird.f32 %v630
    %vm668 = vweird.f32 %v662
    %vm669 = vmor %vm667, %vm668
    %v670 = vsel %vm669, %v662, %v666
    %v671 = vand.u32 2147483647, %v630
    %vm672 = vcmp.eq.f32.partialorder %v671, 8.507059e+37
    %v673 = vand.u32 %v630, 2147483648
    %v674 = vor.u32 1.1754944e-38, %v673
    %v675 = vsel %vm672, %v674, %v670
    %v676 = vmul.f32 1.0, %v675
    %v677 = vrcp.pop %v631
    %v678 = vmul.f32 %v631, %v677
    %v679 = vsub.f32 1.0, %v678
    %v680 = vmul.f32 %v677, %v679
    %v681 = vadd.f32 %v677, %v680
    %vm682 = vweird.f32 %v631
    %vm683 = vweird.f32 %v677
    %vm684 = vmor %vm682, %vm683
    %v685 = vsel %vm684, %v677, %v681
    %v686 = vand.u32 2147483647, %v631
    %vm687 = vcmp.eq.f32.partialorder %v686, 8.507059e+37
    %v688 = vand.u32 %v631, 2147483648
    %v689 = vor.u32 1.1754944e-38, %v688
    %v690 = vsel %vm687, %v689, %v685
    %v691 = vmul.f32 1.0, %v690
    %v692 = vrcp.pop %v632
    %v693 = vmul.f32 %v632, %v692
    %v694 = vsub.f32 1.0, %v693
    %v695 = vmul.f32 %v692, %v694
    %v696 = vadd.f32 %v692, %v695
    %vm697 = vweird.f32 %v632
    %vm698 = vweird.f32 %v692
    %vm699 = vmor %vm697, %vm698
    %v700 = vsel %vm699, %v692, %v696
    %v701 = vand.u32 2147483647, %v632
    %vm702 = vcmp.eq.f32.partialorder %v701, 8.507059e+37
    %v703 = vand.u32 %v632, 2147483648
    %v704 = vor.u32 1.1754944e-38, %v703
    %v705 = vsel %vm702, %v704, %v700
    %v706 = vmul.f32 1.0, %v705
    %v707 = vrcp.pop %v633
    %v708 = vmul.f32 %v633, %v707
    %v709 = vsub.f32 1.0, %v708
    %v710 = vmul.f32 %v707, %v709
    %v711 = vadd.f32 %v707, %v710
    %vm712 = vweird.f32 %v633
    %vm713 = vweird.f32 %v707
    %vm714 = vmor %vm712, %vm713
    %v715 = vsel %vm714, %v707, %v711
    %v716 = vand.u32 2147483647, %v633
    %vm717 = vcmp.eq.f32.partialorder %v716, 8.507059e+37
    %v718 = vand.u32 %v633, 2147483648
    %v719 = vor.u32 1.1754944e-38, %v718
    %v720 = vsel %vm717, %v719, %v715
    %v721 = vmul.f32 1.0, %v720
    %v722 = vrcp.pop %v634
    %v723 = vmul.f32 %v634, %v722
    %v724 = vsub.f32 1.0, %v723
    %v725 = vmul.f32 %v722, %v724
    %v726 = vadd.f32 %v722, %v725
    %vm727 = vweird.f32 %v634
    %vm728 = vweird.f32 %v722
    %vm729 = vmor %vm727, %vm728
    %v730 = vsel %vm729, %v722, %v726
    %v731 = vand.u32 2147483647, %v634
    %vm732 = vcmp.eq.f32.partialorder %v731, 8.507059e+37
    %v733 = vand.u32 %v634, 2147483648
    %v734 = vor.u32 1.1754944e-38, %v733
    %v735 = vsel %vm732, %v734, %v730
    %v736 = vmul.f32 1.0, %v735
    %v737 = vrcp.pop %v635
    %v738 = vmul.f32 %v635, %v737
    %v739 = vsub.f32 1.0, %v738
    %v740 = vmul.f32 %v737, %v739
    %v741 = vadd.f32 %v737, %v740
    %vm742 = vweird.f32 %v635
    %vm743 = vweird.f32 %v737
    %vm744 = vmor %vm742, %vm743
    %v745 = vsel %vm744, %v737, %v741
    %v746 = vand.u32 2147483647, %v635
    %vm747 = vcmp.eq.f32.partialorder %v746, 8.507059e+37
    %v748 = vand.u32 %v635, 2147483648
    %v749 = vor.u32 1.1754944e-38, %v748
    %v750 = vsel %vm747, %v749, %v745
    %v751 = vmul.f32 1.0, %v750
    %v752 = vrcp.pop %v636
    %v753 = vmul.f32 %v636, %v752
    %v754 = vsub.f32 1.0, %v753
    %v755 = vmul.f32 %v752, %v754
    %v756 = vadd.f32 %v752, %v755
    %vm757 = vweird.f32 %v636
    %vm758 = vweird.f32 %v752
    %vm759 = vmor %vm757, %vm758
    %v760 = vsel %vm759, %v752, %v756
    %v761 = vand.u32 2147483647, %v636
    %vm762 = vcmp.eq.f32.partialorder %v761, 8.507059e+37
    %v763 = vand.u32 %v636, 2147483648
    %v764 = vor.u32 1.1754944e-38, %v763
    %v765 = vsel %vm762, %v764, %v760
    %v766 = vmul.f32 1.0, %v765
    %v767 = vrcp.pop %v637
    %v768 = vmul.f32 %v637, %v767
    %v769 = vsub.f32 1.0, %v768
    %v770 = vmul.f32 %v767, %v769
    %v771 = vadd.f32 %v767, %v770
    %vm772 = vweird.f32 %v637
    %vm773 = vweird.f32 %v767
    %vm774 = vmor %vm772, %vm773
    %v775 = vsel %vm774, %v767, %v771
    %v776 = vand.u32 2147483647, %v637
    %vm777 = vcmp.eq.f32.partialorder %v776, 8.507059e+37
    %v778 = vand.u32 %v637, 2147483648
    %v779 = vor.u32 1.1754944e-38, %v778
    %v780 = vsel %vm777, %v779, %v775
    %v781 = vmul.f32 1.0, %v780
    %v782 = vrcp.pop %v638
    %v783 = vmul.f32 %v638, %v782
    %v784 = vsub.f32 1.0, %v783
    %v785 = vmul.f32 %v782, %v784
    %v786 = vadd.f32 %v782, %v785
    %vm787 = vweird.f32 %v638
    %vm788 = vweird.f32 %v782
    %vm789 = vmor %vm787, %vm788
    %v790 = vsel %vm789, %v782, %v786
    %v791 = vand.u32 2147483647, %v638
    %vm792 = vcmp.eq.f32.partialorder %v791, 8.507059e+37
    %v793 = vand.u32 %v638, 2147483648
    %v794 = vor.u32 1.1754944e-38, %v793
    %v795 = vsel %vm792, %v794, %v790
    %v796 = vmul.f32 1.0, %v795
    %v797 = vrcp.pop %v639
    %v798 = vmul.f32 %v639, %v797
    %v799 = vsub.f32 1.0, %v798
    %v800 = vmul.f32 %v797, %v799
    %v801 = vadd.f32 %v797, %v800
    %vm802 = vweird.f32 %v639
    %vm803 = vweird.f32 %v797
    %vm804 = vmor %vm802, %vm803
    %v805 = vsel %vm804, %v797, %v801
    %v806 = vand.u32 2147483647, %v639
    %vm807 = vcmp.eq.f32.partialorder %v806, 8.507059e+37
    %v808 = vand.u32 %v639, 2147483648
    %v809 = vor.u32 1.1754944e-38, %v808
    %v810 = vsel %vm807, %v809, %v805
    %v811 = vmul.f32 1.0, %v810
    %v812 = vrcp.pop %v640
    %v813 = vmul.f32 %v640, %v812
    %v814 = vsub.f32 1.0, %v813
    %v815 = vmul.f32 %v812, %v814
    %v816 = vadd.f32 %v812, %v815
    %vm817 = vweird.f32 %v640
    %vm818 = vweird.f32 %v812
    %vm819 = vmor %vm817, %vm818
    %v820 = vsel %vm819, %v812, %v816
    %v821 = vand.u32 2147483647, %v640
    %vm822 = vcmp.eq.f32.partialorder %v821, 8.507059e+37
    %v823 = vand.u32 %v640, 2147483648
    %v824 = vor.u32 1.1754944e-38, %v823
    %v825 = vsel %vm822, %v824, %v820
    %v826 = vmul.f32 1.0, %v825
    %v827 = vrcp.pop %v641
    %v828 = vmul.f32 %v641, %v827
    %v829 = vsub.f32 1.0, %v828
    %v830 = vmul.f32 %v827, %v829
    %v831 = vadd.f32 %v827, %v830
    %vm832 = vweird.f32 %v641
    %vm833 = vweird.f32 %v827
    %vm834 = vmor %vm832, %vm833
    %v835 = vsel %vm834, %v827, %v831
    %v836 = vand.u32 2147483647, %v641
    %vm837 = vcmp.eq.f32.partialorder %v836, 8.507059e+37
    %v838 = vand.u32 %v641, 2147483648
    %v839 = vor.u32 1.1754944e-38, %v838
    %v840 = vsel %vm837, %v839, %v835
    %v841 = vmul.f32 1.0, %v840
    %v842 = vrcp.pop %v642
    %v843 = vmul.f32 %v642, %v842
    %v844 = vsub.f32 1.0, %v843
    %v845 = vmul.f32 %v842, %v844
    %v846 = vadd.f32 %v842, %v845
    %vm847 = vweird.f32 %v642
    %vm848 = vweird.f32 %v842
    %vm849 = vmor %vm847, %vm848
    %v850 = vsel %vm849, %v842, %v846
    %v851 = vand.u32 2147483647, %v642
    %vm852 = vcmp.eq.f32.partialorder %v851, 8.507059e+37
    %v853 = vand.u32 %v642, 2147483648
    %v854 = vor.u32 1.1754944e-38, %v853
    %v855 = vsel %vm852, %v854, %v850
    %v856 = vmul.f32 1.0, %v855
    %v857 = vrcp.pop %v643
    %v858 = vmul.f32 %v643, %v857
    %v859 = vsub.f32 1.0, %v858
    %v860 = vmul.f32 %v857, %v859
    %v861 = vadd.f32 %v857, %v860
    %vm862 = vweird.f32 %v643
    %vm863 = vweird.f32 %v857
    %vm864 = vmor %vm862, %vm863
    %v865 = vsel %vm864, %v857, %v861
    %v866 = vand.u32 2147483647, %v643
    %vm867 = vcmp.eq.f32.partialorder %v866, 8.507059e+37
    %v868 = vand.u32 %v643, 2147483648
    %v869 = vor.u32 1.1754944e-38, %v868
    %v870 = vsel %vm867, %v869, %v865
    %v871 = vmul.f32 1.0, %v870
    %v872 = vrcp.pop %v644
    %v873 = vmul.f32 %v644, %v872
    %v874 = vsub.f32 1.0, %v873
    %v875 = vmul.f32 %v872, %v874
    %v876 = vadd.f32 %v872, %v875
    %vm877 = vweird.f32 %v644
    %vm878 = vweird.f32 %v872
    %vm879 = vmor %vm877, %vm878
    %v880 = vsel %vm879, %v872, %v876
    %v881 = vand.u32 2147483647, %v644
    %vm882 = vcmp.eq.f32.partialorder %v881, 8.507059e+37
    %v883 = vand.u32 %v644, 2147483648
    %v884 = vor.u32 1.1754944e-38, %v883
    %v885 = vsel %vm882, %v884, %v880
    %v886 = vmul.f32 1.0, %v885
    %v887 = vrcp.pop %v645
    %v888 = vmul.f32 %v645, %v887
    %v889 = vsub.f32 1.0, %v888
    %v890 = vmul.f32 %v887, %v889
    %v891 = vadd.f32 %v887, %v890
    %vm892 = vweird.f32 %v645
    %vm893 = vweird.f32 %v887
    %vm894 = vmor %vm892, %vm893
    %v895 = vsel %vm894, %v887, %v891
    %v896 = vand.u32 2147483647, %v645
    %vm897 = vcmp.eq.f32.partialorder %v896, 8.507059e+37
    %v898 = vand.u32 %v645, 2147483648
    %v899 = vor.u32 1.1754944e-38, %v898
    %v900 = vsel %vm897, %v899, %v895
    %v901 = vmul.f32 1.0, %v900
    %v902 = vrcp.pop %v646
    %v903 = vmul.f32 %v646, %v902
    %v904 = vsub.f32 1.0, %v903
    %v905 = vmul.f32 %v902, %v904
    %v906 = vadd.f32 %v902, %v905
    %vm907 = vweird.f32 %v646
    %vm908 = vweird.f32 %v902
    %vm909 = vmor %vm907, %vm908
    %v910 = vsel %vm909, %v902, %v906
    %v911 = vand.u32 2147483647, %v646
    %vm912 = vcmp.eq.f32.partialorder %v911, 8.507059e+37
    %v913 = vand.u32 %v646, 2147483648
    %v914 = vor.u32 1.1754944e-38, %v913
    %v915 = vsel %vm912, %v914, %v910
    %v916 = vmul.f32 1.0, %v915
    %v917 = vrcp.pop %v647
    %v918 = vmul.f32 %v647, %v917
    %v919 = vsub.f32 1.0, %v918
    %v920 = vmul.f32 %v917, %v919
    %v921 = vadd.f32 %v917, %v920
    %vm922 = vweird.f32 %v647
    %vm923 = vweird.f32 %v917
    %vm924 = vmor %vm922, %vm923
    %v925 = vsel %vm924, %v917, %v921
    %v926 = vand.u32 2147483647, %v647
    %vm927 = vcmp.eq.f32.partialorder %v926, 8.507059e+37
    %v928 = vand.u32 %v647, 2147483648
    %v929 = vor.u32 1.1754944e-38, %v928
    %v930 = vsel %vm927, %v929, %v925
    %v931 = vmul.f32 1.0, %v930
    %v932 = vrcp.pop %v648
    %v933 = vmul.f32 %v648, %v932
    %v934 = vsub.f32 1.0, %v933
    %v935 = vmul.f32 %v932, %v934
    %v936 = vadd.f32 %v932, %v935
    %vm937 = vweird.f32 %v648
    %vm938 = vweird.f32 %v932
    %vm939 = vmor %vm937, %vm938
    %v940 = vsel %vm939, %v932, %v936
    %v941 = vand.u32 2147483647, %v648
    %vm942 = vcmp.eq.f32.partialorder %v941, 8.507059e+37
    %v943 = vand.u32 %v648, 2147483648
    %v944 = vor.u32 1.1754944e-38, %v943
    %v945 = vsel %vm942, %v944, %v940
    %v946 = vmul.f32 1.0, %v945
    %v947 = vrcp.pop %v649
    %v948 = vmul.f32 %v649, %v947
    %v949 = vsub.f32 1.0, %v948
    %v950 = vmul.f32 %v947, %v949
    %v951 = vadd.f32 %v947, %v950
    %vm952 = vweird.f32 %v649
    %vm953 = vweird.f32 %v947
    %vm954 = vmor %vm952, %vm953
    %v955 = vsel %vm954, %v947, %v951
    %v956 = vand.u32 2147483647, %v649
    %vm957 = vcmp.eq.f32.partialorder %v956, 8.507059e+37
    %v958 = vand.u32 %v649, 2147483648
    %v959 = vor.u32 1.1754944e-38, %v958
    %v960 = vsel %vm957, %v959, %v955
    %v961 = vmul.f32 1.0, %v960
    %v962 = vrcp.pop %v650
    %v963 = vmul.f32 %v650, %v962
    %v964 = vsub.f32 1.0, %v963
    %v965 = vmul.f32 %v962, %v964
    %v966 = vadd.f32 %v962, %v965
    %vm967 = vweird.f32 %v650
    %vm968 = vweird.f32 %v962
    %vm969 = vmor %vm967, %vm968
    %v970 = vsel %vm969, %v962, %v966
    %v971 = vand.u32 2147483647, %v650
    %vm972 = vcmp.eq.f32.partialorder %v971, 8.507059e+37
    %v973 = vand.u32 %v650, 2147483648
    %v974 = vor.u32 1.1754944e-38, %v973
    %v975 = vsel %vm972, %v974, %v970
    %v976 = vmul.f32 1.0, %v975
    %v977 = vrcp.pop %v651
    %v978 = vmul.f32 %v651, %v977
    %v979 = vsub.f32 1.0, %v978
    %v980 = vmul.f32 %v977, %v979
    %v981 = vadd.f32 %v977, %v980
    %vm982 = vweird.f32 %v651
    %vm983 = vweird.f32 %v977
    %vm984 = vmor %vm982, %vm983
    %v985 = vsel %vm984, %v977, %v981
    %v986 = vand.u32 2147483647, %v651
    %vm987 = vcmp.eq.f32.partialorder %v986, 8.507059e+37
    %v988 = vand.u32 %v651, 2147483648
    %v989 = vor.u32 1.1754944e-38, %v988
    %v990 = vsel %vm987, %v989, %v985
    %v991 = vmul.f32 1.0, %v990
    %v992 = vrcp.pop %v652
    %v993 = vmul.f32 %v652, %v992
    %v994 = vsub.f32 1.0, %v993
    %v995 = vmul.f32 %v992, %v994
    %v996 = vadd.f32 %v992, %v995
    %vm997 = vweird.f32 %v652
    %vm998 = vweird.f32 %v992
    %vm999 = vmor %vm997, %vm998
    %v1000 = vsel %vm999, %v992, %v996
    %v1001 = vand.u32 2147483647, %v652
    %vm1002 = vcmp.eq.f32.partialorder %v1001, 8.507059e+37
    %v1003 = vand.u32 %v652, 2147483648
    %v1004 = vor.u32 1.1754944e-38, %v1003
    %v1005 = vsel %vm1002, %v1004, %v1000
    %v1006 = vmul.f32 1.0, %v1005
    %v1007 = vrcp.pop %v653
    %v1008 = vmul.f32 %v653, %v1007
    %v1009 = vsub.f32 1.0, %v1008
    %v1010 = vmul.f32 %v1007, %v1009
    %v1011 = vadd.f32 %v1007, %v1010
    %vm1012 = vweird.f32 %v653
    %vm1013 = vweird.f32 %v1007
    %vm1014 = vmor %vm1012, %vm1013
    %v1015 = vsel %vm1014, %v1007, %v1011
    %v1016 = vand.u32 2147483647, %v653
    %vm1017 = vcmp.eq.f32.partialorder %v1016, 8.507059e+37
    %v1018 = vand.u32 %v653, 2147483648
    %v1019 = vor.u32 1.1754944e-38, %v1018
    %v1020 = vsel %vm1017, %v1019, %v1015
    %v1021 = vmul.f32 1.0, %v1020
    %v1022 = vrcp.pop %v654
    %v1023 = vmul.f32 %v654, %v1022
    %v1024 = vsub.f32 1.0, %v1023
    %v1025 = vmul.f32 %v1022, %v1024
    %v1026 = vadd.f32 %v1022, %v1025
    %vm1027 = vweird.f32 %v654
    %vm1028 = vweird.f32 %v1022
    %vm1029 = vmor %vm1027, %vm1028
    %v1030 = vsel %vm1029, %v1022, %v1026
    %v1031 = vand.u32 2147483647, %v654
    %vm1032 = vcmp.eq.f32.partialorder %v1031, 8.507059e+37
    %v1033 = vand.u32 %v654, 2147483648
    %v1034 = vor.u32 1.1754944e-38, %v1033
    %v1035 = vsel %vm1032, %v1034, %v1030
    %v1036 = vmul.f32 1.0, %v1035
    %v1037 = vrcp.pop %v655
    %v1038 = vmul.f32 %v655, %v1037
    %v1039 = vsub.f32 1.0, %v1038
    %v1040 = vmul.f32 %v1037, %v1039
    %v1041 = vadd.f32 %v1037, %v1040
    %vm1042 = vweird.f32 %v655
    %vm1043 = vweird.f32 %v1037
    %vm1044 = vmor %vm1042, %vm1043
    %v1045 = vsel %vm1044, %v1037, %v1041
    %v1046 = vand.u32 2147483647, %v655
    %vm1047 = vcmp.eq.f32.partialorder %v1046, 8.507059e+37
    %v1048 = vand.u32 %v655, 2147483648
    %v1049 = vor.u32 1.1754944e-38, %v1048
    %v1050 = vsel %vm1047, %v1049, %v1045
    %v1051 = vmul.f32 1.0, %v1050
    %v1052 = vrcp.pop %v656
    %v1053 = vmul.f32 %v656, %v1052
    %v1054 = vsub.f32 1.0, %v1053
    %v1055 = vmul.f32 %v1052, %v1054
    %v1056 = vadd.f32 %v1052, %v1055
    %vm1057 = vweird.f32 %v656
    %vm1058 = vweird.f32 %v1052
    %vm1059 = vmor %vm1057, %vm1058
    %v1060 = vsel %vm1059, %v1052, %v1056
    %v1061 = vand.u32 2147483647, %v656
    %vm1062 = vcmp.eq.f32.partialorder %v1061, 8.507059e+37
    %v1063 = vand.u32 %v656, 2147483648
    %v1064 = vor.u32 1.1754944e-38, %v1063
    %v1065 = vsel %vm1062, %v1064, %v1060
    %v1066 = vmul.f32 1.0, %v1065
    %v1067 = vrcp.pop %v657
    %v1068 = vmul.f32 %v657, %v1067
    %v1069 = vsub.f32 1.0, %v1068
    %v1070 = vmul.f32 %v1067, %v1069
    %v1071 = vadd.f32 %v1067, %v1070
    %vm1072 = vweird.f32 %v657
    %vm1073 = vweird.f32 %v1067
    %vm1074 = vmor %vm1072, %vm1073
    %v1075 = vsel %vm1074, %v1067, %v1071
    %v1076 = vand.u32 2147483647, %v657
    %vm1077 = vcmp.eq.f32.partialorder %v1076, 8.507059e+37
    %v1078 = vand.u32 %v657, 2147483648
    %v1079 = vor.u32 1.1754944e-38, %v1078
    %v1080 = vsel %vm1077, %v1079, %v1075
    %v1081 = vmul.f32 1.0, %v1080
    %v1082 = vrcp.pop %v658
    %v1083 = vmul.f32 %v658, %v1082
    %v1084 = vsub.f32 1.0, %v1083
    %v1085 = vmul.f32 %v1082, %v1084
    %v1086 = vadd.f32 %v1082, %v1085
    %vm1087 = vweird.f32 %v658
    %vm1088 = vweird.f32 %v1082
    %vm1089 = vmor %vm1087, %vm1088
    %v1090 = vsel %vm1089, %v1082, %v1086
    %v1091 = vand.u32 2147483647, %v658
    %vm1092 = vcmp.eq.f32.partialorder %v1091, 8.507059e+37
    %v1093 = vand.u32 %v658, 2147483648
    %v1094 = vor.u32 1.1754944e-38, %v1093
    %v1095 = vsel %vm1092, %v1094, %v1090
    %v1096 = vmul.f32 1.0, %v1095
    %v1097 = vrcp.pop %v659
    %v1098 = vmul.f32 %v659, %v1097
    %v1099 = vsub.f32 1.0, %v1098
    %v1100 = vmul.f32 %v1097, %v1099
    %v1101 = vadd.f32 %v1097, %v1100
    %vm1102 = vweird.f32 %v659
    %vm1103 = vweird.f32 %v1097
    %vm1104 = vmor %vm1102, %vm1103
    %v1105 = vsel %vm1104, %v1097, %v1101
    %v1106 = vand.u32 2147483647, %v659
    %vm1107 = vcmp.eq.f32.partialorder %v1106, 8.507059e+37
    %v1108 = vand.u32 %v659, 2147483648
    %v1109 = vor.u32 1.1754944e-38, %v1108
    %v1110 = vsel %vm1107, %v1109, %v1105
    %v1111 = vmul.f32 1.0, %v1110
    %v1112 = vrcp.pop %v660
    %v1113 = vmul.f32 %v660, %v1112
    %v1114 = vsub.f32 1.0, %v1113
    %v1115 = vmul.f32 %v1112, %v1114
    %v1116 = vadd.f32 %v1112, %v1115
    %vm1117 = vweird.f32 %v660
    %vm1118 = vweird.f32 %v1112
    %vm1119 = vmor %vm1117, %vm1118
    %v1120 = vsel %vm1119, %v1112, %v1116
    %v1121 = vand.u32 2147483647, %v660
    %vm1122 = vcmp.eq.f32.partialorder %v1121, 8.507059e+37
    %v1123 = vand.u32 %v660, 2147483648
    %v1124 = vor.u32 1.1754944e-38, %v1123
    %v1125 = vsel %vm1122, %v1124, %v1120
    %v1126 = vmul.f32 1.0, %v1125
    %v1127 = vrcp.pop %v661
    %v1128 = vmul.f32 %v661, %v1127
    %v1129 = vsub.f32 1.0, %v1128
    %v1130 = vmul.f32 %v1127, %v1129
    %v1131 = vadd.f32 %v1127, %v1130
    %vm1132 = vweird.f32 %v661
    %vm1133 = vweird.f32 %v1127
    %vm1134 = vmor %vm1132, %vm1133
    %v1135 = vsel %vm1134, %v1127, %v1131
    %v1136 = vand.u32 2147483647, %v661
    %vm1137 = vcmp.eq.f32.partialorder %v1136, 8.507059e+37
    %v1138 = vand.u32 %v661, 2147483648
    %v1139 = vor.u32 1.1754944e-38, %v1138
    %v1140 = vsel %vm1137, %v1139, %v1135
    %v1141 = vmul.f32 1.0, %v1140
    %v1174 = vperm.slane %v676, 0
    %v1175 = vperm.slane %v676, 1
    %v1176 = vperm.slane %v676, 2
    %v1177 = vperm.slane %v676, 3
    %v1178 = vperm.slane %v676, 4
    %v1179 = vperm.slane %v676, 5
    %v1180 = vperm.slane %v676, 6
    %v1181 = vperm.slane %v676, 7
    %v1182 = vperm.slane %v691, 0
    %v1183 = vperm.slane %v691, 1
    %v1184 = vperm.slane %v691, 2
    %v1185 = vperm.slane %v691, 3
    %v1186 = vperm.slane %v691, 4
    %v1187 = vperm.slane %v691, 5
    %v1188 = vperm.slane %v691, 6
    %v1189 = vperm.slane %v691, 7
    %v1190 = vperm.slane %v706, 0
    %v1191 = vperm.slane %v706, 1
    %v1192 = vperm.slane %v706, 2
    %v1193 = vperm.slane %v706, 3
    %v1194 = vperm.slane %v706, 4
    %v1195 = vperm.slane %v706, 5
    %v1196 = vperm.slane %v706, 6
    %v1197 = vperm.slane %v706, 7
    %v1198 = vperm.slane %v721, 0
    %v1199 = vperm.slane %v721, 1
    %v1200 = vperm.slane %v721, 2
    %v1201 = vperm.slane %v721, 3
    %v1202 = vperm.slane %v721, 4
    %v1203 = vperm.slane %v721, 5
    %v1204 = vperm.slane %v721, 6
    %v1205 = vperm.slane %v721, 7
    %v1206 = vperm.slane %v736, 0
    %v1207 = vperm.slane %v736, 1
    %v1208 = vperm.slane %v736, 2
    %v1209 = vperm.slane %v736, 3
    %v1210 = vperm.slane %v736, 4
    %v1211 = vperm.slane %v736, 5
    %v1212 = vperm.slane %v736, 6
    %v1213 = vperm.slane %v736, 7
    %v1214 = vperm.slane %v751, 0
    %v1215 = vperm.slane %v751, 1
    %v1216 = vperm.slane %v751, 2
    %v1217 = vperm.slane %v751, 3
    %v1218 = vperm.slane %v751, 4
    %v1219 = vperm.slane %v751, 5
    %v1220 = vperm.slane %v751, 6
    %v1221 = vperm.slane %v751, 7
    %v1222 = vperm.slane %v766, 0
    %v1223 = vperm.slane %v766, 1
    %v1224 = vperm.slane %v766, 2
    %v1225 = vperm.slane %v766, 3
    %v1226 = vperm.slane %v766, 4
    %v1227 = vperm.slane %v766, 5
    %v1228 = vperm.slane %v766, 6
    %v1229 = vperm.slane %v766, 7
    %v1230 = vperm.slane %v781, 0
    %v1231 = vperm.slane %v781, 1
    %v1232 = vperm.slane %v781, 2
    %v1233 = vperm.slane %v781, 3
    %v1234 = vperm.slane %v781, 4
    %v1235 = vperm.slane %v781, 5
    %v1236 = vperm.slane %v781, 6
    %v1237 = vperm.slane %v781, 7
    %v1238 = vperm.slane %v796, 0
    %v1239 = vperm.slane %v796, 1
    %v1240 = vperm.slane %v796, 2
    %v1241 = vperm.slane %v796, 3
    %v1242 = vperm.slane %v796, 4
    %v1243 = vperm.slane %v796, 5
    %v1244 = vperm.slane %v796, 6
    %v1245 = vperm.slane %v796, 7
    %v1246 = vperm.slane %v811, 0
    %v1247 = vperm.slane %v811, 1
    %v1248 = vperm.slane %v811, 2
    %v1249 = vperm.slane %v811, 3
    %v1250 = vperm.slane %v811, 4
    %v1251 = vperm.slane %v811, 5
    %v1252 = vperm.slane %v811, 6
    %v1253 = vperm.slane %v811, 7
    %v1254 = vperm.slane %v826, 0
    %v1255 = vperm.slane %v826, 1
    %v1256 = vperm.slane %v826, 2
    %v1257 = vperm.slane %v826, 3
    %v1258 = vperm.slane %v826, 4
    %v1259 = vperm.slane %v826, 5
    %v1260 = vperm.slane %v826, 6
    %v1261 = vperm.slane %v826, 7
    %v1262 = vperm.slane %v841, 0
    %v1263 = vperm.slane %v841, 1
    %v1264 = vperm.slane %v841, 2
    %v1265 = vperm.slane %v841, 3
    %v1266 = vperm.slane %v841, 4
    %v1267 = vperm.slane %v841, 5
    %v1268 = vperm.slane %v841, 6
    %v1269 = vperm.slane %v841, 7
    %v1270 = vperm.slane %v856, 0
    %v1271 = vperm.slane %v856, 1
    %v1272 = vperm.slane %v856, 2
    %v1273 = vperm.slane %v856, 3
    %v1274 = vperm.slane %v856, 4
    %v1275 = vperm.slane %v856, 5
    %v1276 = vperm.slane %v856, 6
    %v1277 = vperm.slane %v856, 7
    %v1278 = vperm.slane %v871, 0
    %v1279 = vperm.slane %v871, 1
    %v1280 = vperm.slane %v871, 2
    %v1281 = vperm.slane %v871, 3
    %v1282 = vperm.slane %v871, 4
    %v1283 = vperm.slane %v871, 5
    %v1284 = vperm.slane %v871, 6
    %v1285 = vperm.slane %v871, 7
    %v1286 = vperm.slane %v886, 0
    %v1287 = vperm.slane %v886, 1
    %v1288 = vperm.slane %v886, 2
    %v1289 = vperm.slane %v886, 3
    %v1290 = vperm.slane %v886, 4
    %v1291 = vperm.slane %v886, 5
    %v1292 = vperm.slane %v886, 6
    %v1293 = vperm.slane %v886, 7
    %v1294 = vperm.slane %v901, 0
    %v1295 = vperm.slane %v901, 1
    %v1296 = vperm.slane %v901, 2
    %v1297 = vperm.slane %v901, 3
    %v1298 = vperm.slane %v901, 4
    %v1299 = vperm.slane %v901, 5
    %v1300 = vperm.slane %v901, 6
    %v1301 = vperm.slane %v901, 7
    %v1302 = vperm.slane %v916, 0
    %v1303 = vperm.slane %v916, 1
    %v1304 = vperm.slane %v916, 2
    %v1305 = vperm.slane %v916, 3
    %v1306 = vperm.slane %v916, 4
    %v1307 = vperm.slane %v916, 5
    %v1308 = vperm.slane %v916, 6
    %v1309 = vperm.slane %v916, 7
    %v1310 = vperm.slane %v931, 0
    %v1311 = vperm.slane %v931, 1
    %v1312 = vperm.slane %v931, 2
    %v1313 = vperm.slane %v931, 3
    %v1314 = vperm.slane %v931, 4
    %v1315 = vperm.slane %v931, 5
    %v1316 = vperm.slane %v931, 6
    %v1317 = vperm.slane %v931, 7
    %v1318 = vperm.slane %v946, 0
    %v1319 = vperm.slane %v946, 1
    %v1320 = vperm.slane %v946, 2
    %v1321 = vperm.slane %v946, 3
    %v1322 = vperm.slane %v946, 4
    %v1323 = vperm.slane %v946, 5
    %v1324 = vperm.slane %v946, 6
    %v1325 = vperm.slane %v946, 7
    %v1326 = vperm.slane %v961, 0
    %v1327 = vperm.slane %v961, 1
    %v1328 = vperm.slane %v961, 2
    %v1329 = vperm.slane %v961, 3
    %v1330 = vperm.slane %v961, 4
    %v1331 = vperm.slane %v961, 5
    %v1332 = vperm.slane %v961, 6
    %v1333 = vperm.slane %v961, 7
    %v1334 = vperm.slane %v976, 0
    %v1335 = vperm.slane %v976, 1
    %v1336 = vperm.slane %v976, 2
    %v1337 = vperm.slane %v976, 3
    %v1338 = vperm.slane %v976, 4
    %v1339 = vperm.slane %v976, 5
    %v1340 = vperm.slane %v976, 6
    %v1341 = vperm.slane %v976, 7
    %v1342 = vperm.slane %v991, 0
    %v1343 = vperm.slane %v991, 1
    %v1344 = vperm.slane %v991, 2
    %v1345 = vperm.slane %v991, 3
    %v1346 = vperm.slane %v991, 4
    %v1347 = vperm.slane %v991, 5
    %v1348 = vperm.slane %v991, 6
    %v1349 = vperm.slane %v991, 7
    %v1350 = vperm.slane %v1006, 0
    %v1351 = vperm.slane %v1006, 1
    %v1352 = vperm.slane %v1006, 2
    %v1353 = vperm.slane %v1006, 3
    %v1354 = vperm.slane %v1006, 4
    %v1355 = vperm.slane %v1006, 5
    %v1356 = vperm.slane %v1006, 6
    %v1357 = vperm.slane %v1006, 7
    %v1358 = vperm.slane %v1021, 0
    %v1359 = vperm.slane %v1021, 1
    %v1360 = vperm.slane %v1021, 2
    %v1361 = vperm.slane %v1021, 3
    %v1362 = vperm.slane %v1021, 4
    %v1363 = vperm.slane %v1021, 5
    %v1364 = vperm.slane %v1021, 6
    %v1365 = vperm.slane %v1021, 7
    %v1366 = vperm.slane %v1036, 0
    %v1367 = vperm.slane %v1036, 1
    %v1368 = vperm.slane %v1036, 2
    %v1369 = vperm.slane %v1036, 3
    %v1370 = vperm.slane %v1036, 4
    %v1371 = vperm.slane %v1036, 5
    %v1372 = vperm.slane %v1036, 6
    %v1373 = vperm.slane %v1036, 7
    %v1374 = vperm.slane %v1051, 0
    %v1375 = vperm.slane %v1051, 1
    %v1376 = vperm.slane %v1051, 2
    %v1377 = vperm.slane %v1051, 3
    %v1378 = vperm.slane %v1051, 4
    %v1379 = vperm.slane %v1051, 5
    %v1380 = vperm.slane %v1051, 6
    %v1381 = vperm.slane %v1051, 7
    %v1382 = vperm.slane %v1066, 0
    %v1383 = vperm.slane %v1066, 1
    %v1384 = vperm.slane %v1066, 2
    %v1385 = vperm.slane %v1066, 3
    %v1386 = vperm.slane %v1066, 4
    %v1387 = vperm.slane %v1066, 5
    %v1388 = vperm.slane %v1066, 6
    %v1389 = vperm.slane %v1066, 7
    %v1390 = vperm.slane %v1081, 0
    %v1391 = vperm.slane %v1081, 1
    %v1392 = vperm.slane %v1081, 2
    %v1393 = vperm.slane %v1081, 3
    %v1394 = vperm.slane %v1081, 4
    %v1395 = vperm.slane %v1081, 5
    %v1396 = vperm.slane %v1081, 6
    %v1397 = vperm.slane %v1081, 7
    %v1398 = vperm.slane %v1096, 0
    %v1399 = vperm.slane %v1096, 1
    %v1400 = vperm.slane %v1096, 2
    %v1401 = vperm.slane %v1096, 3
    %v1402 = vperm.slane %v1096, 4
    %v1403 = vperm.slane %v1096, 5
    %v1404 = vperm.slane %v1096, 6
    %v1405 = vperm.slane %v1096, 7
    %v1406 = vperm.slane %v1111, 0
    %v1407 = vperm.slane %v1111, 1
    %v1408 = vperm.slane %v1111, 2
    %v1409 = vperm.slane %v1111, 3
    %v1410 = vperm.slane %v1111, 4
    %v1411 = vperm.slane %v1111, 5
    %v1412 = vperm.slane %v1111, 6
    %v1413 = vperm.slane %v1111, 7
    %v1414 = vperm.slane %v1126, 0
    %v1415 = vperm.slane %v1126, 1
    %v1416 = vperm.slane %v1126, 2
    %v1417 = vperm.slane %v1126, 3
    %v1418 = vperm.slane %v1126, 4
    %v1419 = vperm.slane %v1126, 5
    %v1420 = vperm.slane %v1126, 6
    %v1421 = vperm.slane %v1126, 7
    %v1422 = vperm.slane %v1141, 0
    %v1423 = vperm.slane %v1141, 1
    %v1424 = vperm.slane %v1141, 2
    %v1425 = vperm.slane %v1141, 3
    %v1426 = vperm.slane %v1141, 4
    %v1427 = vperm.slane %v1141, 5
    %v1428 = vperm.slane %v1141, 6
    %v1429 = vperm.slane %v1141, 7
    %1430 = vst [vmem:[#allocation1] ss:$9 sm:$0xff] %v1174
    %s1431 = scalar_lea.vmem [#allocation1], 1
    %1432 = vst [vmem:[%s1431] ss:$9 sm:$0xff] %v1175
    %s1433 = scalar_lea.vmem [#allocation1], 2
    %1434 = vst [vmem:[%s1433] ss:$9 sm:$0xff] %v1176
    %s1435 = scalar_lea.vmem [#allocation1], 3
    %1436 = vst [vmem:[%s1435] ss:$9 sm:$0xff] %v1177
    %s1437 = scalar_lea.vmem [#allocation1], 4
    %1438 = vst [vmem:[%s1437] ss:$9 sm:$0xff] %v1178
    %s1439 = scalar_lea.vmem [#allocation1], 5
    %1440 = vst [vmem:[%s1439] ss:$9 sm:$0xff] %v1179
    %s1441 = scalar_lea.vmem [#allocation1], 6
    %1442 = vst [vmem:[%s1441] ss:$9 sm:$0xff] %v1180
    %s1443 = scalar_lea.vmem [#allocation1], 7
    %1444 = vst [vmem:[%s1443] ss:$9 sm:$0xff] %v1181
    %v1445 = vld [vmem:[#allocation1] sm:$0xff]
    %1446 = vst [vmem:[#allocation1] ss:$9 sm:$0xff] %v1182
    %1447 = vst [vmem:[%s1431] ss:$9 sm:$0xff] %v1183
    %1448 = vst [vmem:[%s1433] ss:$9 sm:$0xff] %v1184
    %1449 = vst [vmem:[%s1435] ss:$9 sm:$0xff] %v1185
    %1450 = vst [vmem:[%s1437] ss:$9 sm:$0xff] %v1186
    %1451 = vst [vmem:[%s1439] ss:$9 sm:$0xff] %v1187
    %1452 = vst [vmem:[%s1441] ss:$9 sm:$0xff] %v1188
    %1453 = vst [vmem:[%s1443] ss:$9 sm:$0xff] %v1189
    %v1454 = vld [vmem:[#allocation1] sm:$0xff]
    %1455 = vst [vmem:[#allocation1] ss:$9 sm:$0xff] %v1190
    %1456 = vst [vmem:[%s1431] ss:$9 sm:$0xff] %v1191
    %1457 = vst [vmem:[%s1433] ss:$9 sm:$0xff] %v1192
    %1458 = vst [vmem:[%s1435] ss:$9 sm:$0xff] %v1193
    %1459 = vst [vmem:[%s1437] ss:$9 sm:$0xff] %v1194
    %1460 = vst [vmem:[%s1439] ss:$9 sm:$0xff] %v1195
    %1461 = vst [vmem:[%s1441] ss:$9 sm:$0xff] %v1196
    %1462 = vst [vmem:[%s1443] ss:$9 sm:$0xff] %v1197
    %v1463 = vld [vmem:[#allocation1] sm:$0xff]
    %1464 = vst [vmem:[#allocation1] ss:$9 sm:$0xff] %v1198
    %1465 = vst [vmem:[%s1431] ss:$9 sm:$0xff] %v1199
    %1466 = vst [vmem:[%s1433] ss:$9 sm:$0xff] %v1200
    %1467 = vst [vmem:[%s1435] ss:$9 sm:$0xff] %v1201
    %1468 = vst [vmem:[%s1437] ss:$9 sm:$0xff] %v1202
    %1469 = vst [vmem:[%s1439] ss:$9 sm:$0xff] %v1203
    %1470 = vst [vmem:[%s1441] ss:$9 sm:$0xff] %v1204
    %1471 = vst [vmem:[%s1443] ss:$9 sm:$0xff] %v1205
    %v1472 = vld [vmem:[#allocation1] sm:$0xff]
    %1473 = vst [vmem:[#allocation1] ss:$9 sm:$0xff] %v1206
    %1474 = vst [vmem:[%s1431] ss:$9 sm:$0xff] %v1207
    %1475 = vst [vmem:[%s1433] ss:$9 sm:$0xff] %v1208
    %1476 = vst [vmem:[%s1435] ss:$9 sm:$0xff] %v1209
    %1477 = vst [vmem:[%s1437] ss:$9 sm:$0xff] %v1210
    %1478 = vst [vmem:[%s1439] ss:$9 sm:$0xff] %v1211
    %1479 = vst [vmem:[%s1441] ss:$9 sm:$0xff] %v1212
    %1480 = vst [vmem:[%s1443] ss:$9 sm:$0xff] %v1213
    %v1481 = vld [vmem:[#allocation1] sm:$0xff]
    %1482 = vst [vmem:[#allocation1] ss:$9 sm:$0xff] %v1214
    %1483 = vst [vmem:[%s1431] ss:$9 sm:$0xff] %v1215
    %1484 = vst [vmem:[%s1433] ss:$9 sm:$0xff] %v1216
    %1485 = vst [vmem:[%s1435] ss:$9 sm:$0xff] %v1217
    %1486 = vst [vmem:[%s1437] ss:$9 sm:$0xff] %v1218
    %1487 = vst [vmem:[%s1439] ss:$9 sm:$0xff] %v1219
    %1488 = vst [vmem:[%s1441] ss:$9 sm:$0xff] %v1220
    %1489 = vst [vmem:[%s1443] ss:$9 sm:$0xff] %v1221
    %v1490 = vld [vmem:[#allocation1] sm:$0xff]
    %1491 = vst [vmem:[#allocation1] ss:$9 sm:$0xff] %v1222
    %1492 = vst [vmem:[%s1431] ss:$9 sm:$0xff] %v1223
    %1493 = vst [vmem:[%s1433] ss:$9 sm:$0xff] %v1224
    %1494 = vst [vmem:[%s1435] ss:$9 sm:$0xff] %v1225
    %1495 = vst [vmem:[%s1437] ss:$9 sm:$0xff] %v1226
    %1496 = vst [vmem:[%s1439] ss:$9 sm:$0xff] %v1227
    %1497 = vst [vmem:[%s1441] ss:$9 sm:$0xff] %v1228
    %1498 = vst [vmem:[%s1443] ss:$9 sm:$0xff] %v1229
    %v1499 = vld [vmem:[#allocation1] sm:$0xff]
    %1500 = vst [vmem:[#allocation1] ss:$9 sm:$0xff] %v1230
    %1501 = vst [vmem:[%s1431] ss:$9 sm:$0xff] %v1231
    %1502 = vst [vmem:[%s1433] ss:$9 sm:$0xff] %v1232
    %1503 = vst [vmem:[%s1435] ss:$9 sm:$0xff] %v1233
    %1504 = vst [vmem:[%s1437] ss:$9 sm:$0xff] %v1234
    %1505 = vst [vmem:[%s1439] ss:$9 sm:$0xff] %v1235
    %1506 = vst [vmem:[%s1441] ss:$9 sm:$0xff] %v1236
    %1507 = vst [vmem:[%s1443] ss:$9 sm:$0xff] %v1237
    %v1508 = vld [vmem:[#allocation1] sm:$0xff]
    %1509 = vst [vmem:[#allocation1] ss:$9 sm:$0xff] %v1238
    %1510 = vst [vmem:[%s1431] ss:$9 sm:$0xff] %v1239
    %1511 = vst [vmem:[%s1433] ss:$9 sm:$0xff] %v1240
    %1512 = vst [vmem:[%s1435] ss:$9 sm:$0xff] %v1241
    %1513 = vst [vmem:[%s1437] ss:$9 sm:$0xff] %v1242
    %1514 = vst [vmem:[%s1439] ss:$9 sm:$0xff] %v1243
    %1515 = vst [vmem:[%s1441] ss:$9 sm:$0xff] %v1244
    %1516 = vst [vmem:[%s1443] ss:$9 sm:$0xff] %v1245
    %v1517 = vld [vmem:[#allocation1] sm:$0xff]
    %1518 = vst [vmem:[#allocation1] ss:$9 sm:$0xff] %v1246
    %1519 = vst [vmem:[%s1431] ss:$9 sm:$0xff] %v1247
    %1520 = vst [vmem:[%s1433] ss:$9 sm:$0xff] %v1248
    %1521 = vst [vmem:[%s1435] ss:$9 sm:$0xff] %v1249
    %1522 = vst [vmem:[%s1437] ss:$9 sm:$0xff] %v1250
    %1523 = vst [vmem:[%s1439] ss:$9 sm:$0xff] %v1251
    %1524 = vst [vmem:[%s1441] ss:$9 sm:$0xff] %v1252
    %1525 = vst [vmem:[%s1443] ss:$9 sm:$0xff] %v1253
    %v1526 = vld [vmem:[#allocation1] sm:$0xff]
    %1527 = vst [vmem:[#allocation1] ss:$9 sm:$0xff] %v1254
    %1528 = vst [vmem:[%s1431] ss:$9 sm:$0xff] %v1255
    %1529 = vst [vmem:[%s1433] ss:$9 sm:$0xff] %v1256
    %1530 = vst [vmem:[%s1435] ss:$9 sm:$0xff] %v1257
    %1531 = vst [vmem:[%s1437] ss:$9 sm:$0xff] %v1258
    %1532 = vst [vmem:[%s1439] ss:$9 sm:$0xff] %v1259
    %1533 = vst [vmem:[%s1441] ss:$9 sm:$0xff] %v1260
    %1534 = vst [vmem:[%s1443] ss:$9 sm:$0xff] %v1261
    %v1535 = vld [vmem:[#allocation1] sm:$0xff]
    %1536 = vst [vmem:[#allocation1] ss:$9 sm:$0xff] %v1262
    %1537 = vst [vmem:[%s1431] ss:$9 sm:$0xff] %v1263
    %1538 = vst [vmem:[%s1433] ss:$9 sm:$0xff] %v1264
    %1539 = vst [vmem:[%s1435] ss:$9 sm:$0xff] %v1265
    %1540 = vst [vmem:[%s1437] ss:$9 sm:$0xff] %v1266
    %1541 = vst [vmem:[%s1439] ss:$9 sm:$0xff] %v1267
    %1542 = vst [vmem:[%s1441] ss:$9 sm:$0xff] %v1268
    %1543 = vst [vmem:[%s1443] ss:$9 sm:$0xff] %v1269
    %v1544 = vld [vmem:[#allocation1] sm:$0xff]
    %1545 = vst [vmem:[#allocation1] ss:$9 sm:$0xff] %v1270
    %1546 = vst [vmem:[%s1431] ss:$9 sm:$0xff] %v1271
    %1547 = vst [vmem:[%s1433] ss:$9 sm:$0xff] %v1272
    %1548 = vst [vmem:[%s1435] ss:$9 sm:$0xff] %v1273
    %1549 = vst [vmem:[%s1437] ss:$9 sm:$0xff] %v1274
    %1550 = vst [vmem:[%s1439] ss:$9 sm:$0xff] %v1275
    %1551 = vst [vmem:[%s1441] ss:$9 sm:$0xff] %v1276
    %1552 = vst [vmem:[%s1443] ss:$9 sm:$0xff] %v1277
    %v1553 = vld [vmem:[#allocation1] sm:$0xff]
    %1554 = vst [vmem:[#allocation1] ss:$9 sm:$0xff] %v1278
    %1555 = vst [vmem:[%s1431] ss:$9 sm:$0xff] %v1279
    %1556 = vst [vmem:[%s1433] ss:$9 sm:$0xff] %v1280
    %1557 = vst [vmem:[%s1435] ss:$9 sm:$0xff] %v1281
    %1558 = vst [vmem:[%s1437] ss:$9 sm:$0xff] %v1282
    %1559 = vst [vmem:[%s1439] ss:$9 sm:$0xff] %v1283
    %1560 = vst [vmem:[%s1441] ss:$9 sm:$0xff] %v1284
    %1561 = vst [vmem:[%s1443] ss:$9 sm:$0xff] %v1285
    %v1562 = vld [vmem:[#allocation1] sm:$0xff]
    %1563 = vst [vmem:[#allocation1] ss:$9 sm:$0xff] %v1286
    %1564 = vst [vmem:[%s1431] ss:$9 sm:$0xff] %v1287
    %1565 = vst [vmem:[%s1433] ss:$9 sm:$0xff] %v1288
    %1566 = vst [vmem:[%s1435] ss:$9 sm:$0xff] %v1289
    %1567 = vst [vmem:[%s1437] ss:$9 sm:$0xff] %v1290
    %1568 = vst [vmem:[%s1439] ss:$9 sm:$0xff] %v1291
    %1569 = vst [vmem:[%s1441] ss:$9 sm:$0xff] %v1292
    %1570 = vst [vmem:[%s1443] ss:$9 sm:$0xff] %v1293
    %v1571 = vld [vmem:[#allocation1] sm:$0xff]
    %1572 = vst [vmem:[#allocation1] ss:$9 sm:$0xff] %v1294
    %1573 = vst [vmem:[%s1431] ss:$9 sm:$0xff] %v1295
    %1574 = vst [vmem:[%s1433] ss:$9 sm:$0xff] %v1296
    %1575 = vst [vmem:[%s1435] ss:$9 sm:$0xff] %v1297
    %1576 = vst [vmem:[%s1437] ss:$9 sm:$0xff] %v1298
    %1577 = vst [vmem:[%s1439] ss:$9 sm:$0xff] %v1299
    %1578 = vst [vmem:[%s1441] ss:$9 sm:$0xff] %v1300
    %1579 = vst [vmem:[%s1443] ss:$9 sm:$0xff] %v1301
    %v1580 = vld [vmem:[#allocation1] sm:$0xff]
    %1581 = vst [vmem:[#allocation1] ss:$9 sm:$0xff] %v1302
    %1582 = vst [vmem:[%s1431] ss:$9 sm:$0xff] %v1303
    %1583 = vst [vmem:[%s1433] ss:$9 sm:$0xff] %v1304
    %1584 = vst [vmem:[%s1435] ss:$9 sm:$0xff] %v1305
    %1585 = vst [vmem:[%s1437] ss:$9 sm:$0xff] %v1306
    %1586 = vst [vmem:[%s1439] ss:$9 sm:$0xff] %v1307
    %1587 = vst [vmem:[%s1441] ss:$9 sm:$0xff] %v1308
    %1588 = vst [vmem:[%s1443] ss:$9 sm:$0xff] %v1309
    %v1589 = vld [vmem:[#allocation1] sm:$0xff]
    %1590 = vst [vmem:[#allocation1] ss:$9 sm:$0xff] %v1310
    %1591 = vst [vmem:[%s1431] ss:$9 sm:$0xff] %v1311
    %1592 = vst [vmem:[%s1433] ss:$9 sm:$0xff] %v1312
    %1593 = vst [vmem:[%s1435] ss:$9 sm:$0xff] %v1313
    %1594 = vst [vmem:[%s1437] ss:$9 sm:$0xff] %v1314
    %1595 = vst [vmem:[%s1439] ss:$9 sm:$0xff] %v1315
    %1596 = vst [vmem:[%s1441] ss:$9 sm:$0xff] %v1316
    %1597 = vst [vmem:[%s1443] ss:$9 sm:$0xff] %v1317
    %v1598 = vld [vmem:[#allocation1] sm:$0xff]
    %1599 = vst [vmem:[#allocation1] ss:$9 sm:$0xff] %v1318
    %1600 = vst [vmem:[%s1431] ss:$9 sm:$0xff] %v1319
    %1601 = vst [vmem:[%s1433] ss:$9 sm:$0xff] %v1320
    %1602 = vst [vmem:[%s1435] ss:$9 sm:$0xff] %v1321
    %1603 = vst [vmem:[%s1437] ss:$9 sm:$0xff] %v1322
    %1604 = vst [vmem:[%s1439] ss:$9 sm:$0xff] %v1323
    %1605 = vst [vmem:[%s1441] ss:$9 sm:$0xff] %v1324
    %1606 = vst [vmem:[%s1443] ss:$9 sm:$0xff] %v1325
    %v1607 = vld [vmem:[#allocation1] sm:$0xff]
    %1608 = vst [vmem:[#allocation1] ss:$9 sm:$0xff] %v1326
    %1609 = vst [vmem:[%s1431] ss:$9 sm:$0xff] %v1327
    %1610 = vst [vmem:[%s1433] ss:$9 sm:$0xff] %v1328
    %1611 = vst [vmem:[%s1435] ss:$9 sm:$0xff] %v1329
    %1612 = vst [vmem:[%s1437] ss:$9 sm:$0xff] %v1330
    %1613 = vst [vmem:[%s1439] ss:$9 sm:$0xff] %v1331
    %1614 = vst [vmem:[%s1441] ss:$9 sm:$0xff] %v1332
    %1615 = vst [vmem:[%s1443] ss:$9 sm:$0xff] %v1333
    %v1616 = vld [vmem:[#allocation1] sm:$0xff]
    %1617 = vst [vmem:[#allocation1] ss:$9 sm:$0xff] %v1334
    %1618 = vst [vmem:[%s1431] ss:$9 sm:$0xff] %v1335
    %1619 = vst [vmem:[%s1433] ss:$9 sm:$0xff] %v1336
    %1620 = vst [vmem:[%s1435] ss:$9 sm:$0xff] %v1337
    %1621 = vst [vmem:[%s1437] ss:$9 sm:$0xff] %v1338
    %1622 = vst [vmem:[%s1439] ss:$9 sm:$0xff] %v1339
    %1623 = vst [vmem:[%s1441] ss:$9 sm:$0xff] %v1340
    %1624 = vst [vmem:[%s1443] ss:$9 sm:$0xff] %v1341
    %v1625 = vld [vmem:[#allocation1] sm:$0xff]
    %1626 = vst [vmem:[#allocation1] ss:$9 sm:$0xff] %v1342
    %1627 = vst [vmem:[%s1431] ss:$9 sm:$0xff] %v1343
    %1628 = vst [vmem:[%s1433] ss:$9 sm:$0xff] %v1344
    %1629 = vst [vmem:[%s1435] ss:$9 sm:$0xff] %v1345
    %1630 = vst [vmem:[%s1437] ss:$9 sm:$0xff] %v1346
    %1631 = vst [vmem:[%s1439] ss:$9 sm:$0xff] %v1347
    %1632 = vst [vmem:[%s1441] ss:$9 sm:$0xff] %v1348
    %1633 = vst [vmem:[%s1443] ss:$9 sm:$0xff] %v1349
    %v1634 = vld [vmem:[#allocation1] sm:$0xff]
    %1635 = vst [vmem:[#allocation1] ss:$9 sm:$0xff] %v1350
    %1636 = vst [vmem:[%s1431] ss:$9 sm:$0xff] %v1351
    %1637 = vst [vmem:[%s1433] ss:$9 sm:$0xff] %v1352
    %1638 = vst [vmem:[%s1435] ss:$9 sm:$0xff] %v1353
    %1639 = vst [vmem:[%s1437] ss:$9 sm:$0xff] %v1354
    %1640 = vst [vmem:[%s1439] ss:$9 sm:$0xff] %v1355
    %1641 = vst [vmem:[%s1441] ss:$9 sm:$0xff] %v1356
    %1642 = vst [vmem:[%s1443] ss:$9 sm:$0xff] %v1357
    %v1643 = vld [vmem:[#allocation1] sm:$0xff]
    %1644 = vst [vmem:[#allocation1] ss:$9 sm:$0xff] %v1358
    %1645 = vst [vmem:[%s1431] ss:$9 sm:$0xff] %v1359
    %1646 = vst [vmem:[%s1433] ss:$9 sm:$0xff] %v1360
    %1647 = vst [vmem:[%s1435] ss:$9 sm:$0xff] %v1361
    %1648 = vst [vmem:[%s1437] ss:$9 sm:$0xff] %v1362
    %1649 = vst [vmem:[%s1439] ss:$9 sm:$0xff] %v1363
    %1650 = vst [vmem:[%s1441] ss:$9 sm:$0xff] %v1364
    %1651 = vst [vmem:[%s1443] ss:$9 sm:$0xff] %v1365
    %v1652 = vld [vmem:[#allocation1] sm:$0xff]
    %1653 = vst [vmem:[#allocation1] ss:$9 sm:$0xff] %v1366
    %1654 = vst [vmem:[%s1431] ss:$9 sm:$0xff] %v1367
    %1655 = vst [vmem:[%s1433] ss:$9 sm:$0xff] %v1368
    %1656 = vst [vmem:[%s1435] ss:$9 sm:$0xff] %v1369
    %1657 = vst [vmem:[%s1437] ss:$9 sm:$0xff] %v1370
    %1658 = vst [vmem:[%s1439] ss:$9 sm:$0xff] %v1371
    %1659 = vst [vmem:[%s1441] ss:$9 sm:$0xff] %v1372
    %1660 = vst [vmem:[%s1443] ss:$9 sm:$0xff] %v1373
    %v1661 = vld [vmem:[#allocation1] sm:$0xff]
    %1662 = vst [vmem:[#allocation1] ss:$9 sm:$0xff] %v1374
    %1663 = vst [vmem:[%s1431] ss:$9 sm:$0xff] %v1375
    %1664 = vst [vmem:[%s1433] ss:$9 sm:$0xff] %v1376
    %1665 = vst [vmem:[%s1435] ss:$9 sm:$0xff] %v1377
    %1666 = vst [vmem:[%s1437] ss:$9 sm:$0xff] %v1378
    %1667 = vst [vmem:[%s1439] ss:$9 sm:$0xff] %v1379
    %1668 = vst [vmem:[%s1441] ss:$9 sm:$0xff] %v1380
    %1669 = vst [vmem:[%s1443] ss:$9 sm:$0xff] %v1381
    %v1670 = vld [vmem:[#allocation1] sm:$0xff]
    %1671 = vst [vmem:[#allocation1] ss:$9 sm:$0xff] %v1382
    %1672 = vst [vmem:[%s1431] ss:$9 sm:$0xff] %v1383
    %1673 = vst [vmem:[%s1433] ss:$9 sm:$0xff] %v1384
    %1674 = vst [vmem:[%s1435] ss:$9 sm:$0xff] %v1385
    %1675 = vst [vmem:[%s1437] ss:$9 sm:$0xff] %v1386
    %1676 = vst [vmem:[%s1439] ss:$9 sm:$0xff] %v1387
    %1677 = vst [vmem:[%s1441] ss:$9 sm:$0xff] %v1388
    %1678 = vst [vmem:[%s1443] ss:$9 sm:$0xff] %v1389
    %v1679 = vld [vmem:[#allocation1] sm:$0xff]
    %1680 = vst [vmem:[#allocation1] ss:$9 sm:$0xff] %v1390
    %1681 = vst [vmem:[%s1431] ss:$9 sm:$0xff] %v1391
    %1682 = vst [vmem:[%s1433] ss:$9 sm:$0xff] %v1392
    %1683 = vst [vmem:[%s1435] ss:$9 sm:$0xff] %v1393
    %1684 = vst [vmem:[%s1437] ss:$9 sm:$0xff] %v1394
    %1685 = vst [vmem:[%s1439] ss:$9 sm:$0xff] %v1395
    %1686 = vst [vmem:[%s1441] ss:$9 sm:$0xff] %v1396
    %1687 = vst [vmem:[%s1443] ss:$9 sm:$0xff] %v1397
    %v1688 = vld [vmem:[#allocation1] sm:$0xff]
    %1689 = vst [vmem:[#allocation1] ss:$9 sm:$0xff] %v1398
    %1690 = vst [vmem:[%s1431] ss:$9 sm:$0xff] %v1399
    %1691 = vst [vmem:[%s1433] ss:$9 sm:$0xff] %v1400
    %1692 = vst [vmem:[%s1435] ss:$9 sm:$0xff] %v1401
    %1693 = vst [vmem:[%s1437] ss:$9 sm:$0xff] %v1402
    %1694 = vst [vmem:[%s1439] ss:$9 sm:$0xff] %v1403
    %1695 = vst [vmem:[%s1441] ss:$9 sm:$0xff] %v1404
    %1696 = vst [vmem:[%s1443] ss:$9 sm:$0xff] %v1405
    %v1697 = vld [vmem:[#allocation1] sm:$0xff]
    %1698 = vst [vmem:[#allocation1] ss:$9 sm:$0xff] %v1406
    %1699 = vst [vmem:[%s1431] ss:$9 sm:$0xff] %v1407
    %1700 = vst [vmem:[%s1433] ss:$9 sm:$0xff] %v1408
    %1701 = vst [vmem:[%s1435] ss:$9 sm:$0xff] %v1409
    %1702 = vst [vmem:[%s1437] ss:$9 sm:$0xff] %v1410
    %1703 = vst [vmem:[%s1439] ss:$9 sm:$0xff] %v1411
    %1704 = vst [vmem:[%s1441] ss:$9 sm:$0xff] %v1412
    %1705 = vst [vmem:[%s1443] ss:$9 sm:$0xff] %v1413
    %v1706 = vld [vmem:[#allocation1] sm:$0xff]
    %1707 = vst [vmem:[#allocation1] ss:$9 sm:$0xff] %v1414
    %1708 = vst [vmem:[%s1431] ss:$9 sm:$0xff] %v1415
    %1709 = vst [vmem:[%s1433] ss:$9 sm:$0xff] %v1416
    %1710 = vst [vmem:[%s1435] ss:$9 sm:$0xff] %v1417
    %1711 = vst [vmem:[%s1437] ss:$9 sm:$0xff] %v1418
    %1712 = vst [vmem:[%s1439] ss:$9 sm:$0xff] %v1419
    %1713 = vst [vmem:[%s1441] ss:$9 sm:$0xff] %v1420
    %1714 = vst [vmem:[%s1443] ss:$9 sm:$0xff] %v1421
    %v1715 = vld [vmem:[#allocation1] sm:$0xff]
    %1716 = vst [vmem:[#allocation1] ss:$9 sm:$0xff] %v1422
    %1717 = vst [vmem:[%s1431] ss:$9 sm:$0xff] %v1423
    %1718 = vst [vmem:[%s1433] ss:$9 sm:$0xff] %v1424
    %1719 = vst [vmem:[%s1435] ss:$9 sm:$0xff] %v1425
    %1720 = vst [vmem:[%s1437] ss:$9 sm:$0xff] %v1426
    %1721 = vst [vmem:[%s1439] ss:$9 sm:$0xff] %v1427
    %1722 = vst [vmem:[%s1441] ss:$9 sm:$0xff] %v1428
    %1723 = vst [vmem:[%s1443] ss:$9 sm:$0xff] %v1429
    %v1724 = vld [vmem:[#allocation1] sm:$0xff]
    %1725 = vset.pattern.permute.xlu0 0
    %1726 = vperm.xlu0 %1725, %v1445
    %v1727 = vpop.permute.xlu0 %1726
    %1728 = vset.pattern.permute.xlu0 0
    %1729 = vperm.xlu0 %1728, %v1454
    %v1730 = vpop.permute.xlu0 %1729
    %1731 = vset.pattern.permute.xlu0 0
    %1732 = vperm.xlu0 %1731, %v1463
    %v1733 = vpop.permute.xlu0 %1732
    %1734 = vset.pattern.permute.xlu0 0
    %1735 = vperm.xlu0 %1734, %v1472
    %v1736 = vpop.permute.xlu0 %1735
    %1737 = vset.pattern.permute.xlu0 0
    %1738 = vperm.xlu0 %1737, %v1481
    %v1739 = vpop.permute.xlu0 %1738
    %1740 = vset.pattern.permute.xlu0 0
    %1741 = vperm.xlu0 %1740, %v1490
    %v1742 = vpop.permute.xlu0 %1741
    %1743 = vset.pattern.permute.xlu0 0
    %1744 = vperm.xlu0 %1743, %v1499
    %v1745 = vpop.permute.xlu0 %1744
    %1746 = vset.pattern.permute.xlu0 0
    %1747 = vperm.xlu0 %1746, %v1508
    %v1748 = vpop.permute.xlu0 %1747
    %1749 = vset.pattern.permute.xlu0 0
    %1750 = vperm.xlu0 %1749, %v1517
    %v1751 = vpop.permute.xlu0 %1750
    %1752 = vset.pattern.permute.xlu0 0
    %1753 = vperm.xlu0 %1752, %v1526
    %v1754 = vpop.permute.xlu0 %1753
    %1755 = vset.pattern.permute.xlu0 0
    %1756 = vperm.xlu0 %1755, %v1535
    %v1757 = vpop.permute.xlu0 %1756
    %1758 = vset.pattern.permute.xlu0 0
    %1759 = vperm.xlu0 %1758, %v1544
    %v1760 = vpop.permute.xlu0 %1759
    %1761 = vset.pattern.permute.xlu0 0
    %1762 = vperm.xlu0 %1761, %v1553
    %v1763 = vpop.permute.xlu0 %1762
    %1764 = vset.pattern.permute.xlu0 0
    %1765 = vperm.xlu0 %1764, %v1562
    %v1766 = vpop.permute.xlu0 %1765
    %1767 = vset.pattern.permute.xlu0 0
    %1768 = vperm.xlu0 %1767, %v1571
    %v1769 = vpop.permute.xlu0 %1768
    %1770 = vset.pattern.permute.xlu0 0
    %1771 = vperm.xlu0 %1770, %v1580
    %v1772 = vpop.permute.xlu0 %1771
    %1773 = vset.pattern.permute.xlu0 0
    %1774 = vperm.xlu0 %1773, %v1589
    %v1775 = vpop.permute.xlu0 %1774
    %1776 = vset.pattern.permute.xlu0 0
    %1777 = vperm.xlu0 %1776, %v1598
    %v1778 = vpop.permute.xlu0 %1777
    %1779 = vset.pattern.permute.xlu0 0
    %1780 = vperm.xlu0 %1779, %v1607
    %v1781 = vpop.permute.xlu0 %1780
    %1782 = vset.pattern.permute.xlu0 0
    %1783 = vperm.xlu0 %1782, %v1616
    %v1784 = vpop.permute.xlu0 %1783
    %1785 = vset.pattern.permute.xlu0 0
    %1786 = vperm.xlu0 %1785, %v1625
    %v1787 = vpop.permute.xlu0 %1786
    %1788 = vset.pattern.permute.xlu0 0
    %1789 = vperm.xlu0 %1788, %v1634
    %v1790 = vpop.permute.xlu0 %1789
    %1791 = vset.pattern.permute.xlu0 0
    %1792 = vperm.xlu0 %1791, %v1643
    %v1793 = vpop.permute.xlu0 %1792
    %1794 = vset.pattern.permute.xlu0 0
    %1795 = vperm.xlu0 %1794, %v1652
    %v1796 = vpop.permute.xlu0 %1795
    %1797 = vset.pattern.permute.xlu0 0
    %1798 = vperm.xlu0 %1797, %v1661
    %v1799 = vpop.permute.xlu0 %1798
    %1800 = vset.pattern.permute.xlu0 0
    %1801 = vperm.xlu0 %1800, %v1670
    %v1802 = vpop.permute.xlu0 %1801
    %1803 = vset.pattern.permute.xlu0 0
    %1804 = vperm.xlu0 %1803, %v1679
    %v1805 = vpop.permute.xlu0 %1804
    %1806 = vset.pattern.permute.xlu0 0
    %1807 = vperm.xlu0 %1806, %v1688
    %v1808 = vpop.permute.xlu0 %1807
    %1809 = vset.pattern.permute.xlu0 0
    %1810 = vperm.xlu0 %1809, %v1697
    %v1811 = vpop.permute.xlu0 %1810
    %1812 = vset.pattern.permute.xlu0 0
    %1813 = vperm.xlu0 %1812, %v1706
    %v1814 = vpop.permute.xlu0 %1813
    %1815 = vset.pattern.permute.xlu0 0
    %1816 = vperm.xlu0 %1815, %v1715
    %v1817 = vpop.permute.xlu0 %1816
    %1818 = vset.pattern.permute.xlu0 0
    %1819 = vperm.xlu0 %1818, %v1724
    %v1820 = vpop.permute.xlu0 %1819
    %v1821 = vlaneseq
    %v1822 = vand.u32 %v1821, 127
    %v1823 = vperm.slane %v1727, %v1822
    %v1824 = vadd.s32 %v1822, 4294967288
    %v1825 = vperm.slane %v1730, %v1824
    %vm1826 = vcmask 130112
    %v1827 = vsel %vm1826, %v1825, %v1823
    %v1828 = vadd.s32 %v1822, 4294967280
    %v1829 = vperm.slane %v1733, %v1828
    %vm1830 = vcmask 195712
    %v1831 = vsel %vm1830, %v1829, %v1827
    %v1832 = vadd.s32 %v1822, 4294967272
    %v1833 = vperm.slane %v1736, %v1832
    %vm1834 = vcmask 261312
    %v1835 = vsel %vm1834, %v1833, %v1831
    %v1836 = vadd.s32 %v1822, 4294967264
    %v1837 = vperm.slane %v1739, %v1836
    %vm1838 = vcmask 326912
    %v1839 = vsel %vm1838, %v1837, %v1835
    %v1840 = vadd.s32 %v1822, 4294967256
    %v1841 = vperm.slane %v1742, %v1840
    %vm1842 = vcmask 392512
    %v1843 = vsel %vm1842, %v1841, %v1839
    %v1844 = vadd.s32 %v1822, 4294967248
    %v1845 = vperm.slane %v1745, %v1844
    %vm1846 = vcmask 458112
    %v1847 = vsel %vm1846, %v1845, %v1843
    %v1848 = vadd.s32 %v1822, 4294967240
    %v1849 = vperm.slane %v1748, %v1848
    %vm1850 = vcmask 523712
    %v1851 = vsel %vm1850, %v1849, %v1847
    %v1852 = vadd.s32 %v1822, 4294967232
    %v1853 = vperm.slane %v1751, %v1852
    %vm1854 = vcmask 589312
    %v1855 = vsel %vm1854, %v1853, %v1851
    %v1856 = vadd.s32 %v1822, 4294967224
    %v1857 = vperm.slane %v1754, %v1856
    %vm1858 = vcmask 654912
    %v1859 = vsel %vm1858, %v1857, %v1855
    %v1860 = vadd.s32 %v1822, 4294967216
    %v1861 = vperm.slane %v1757, %v1860
    %vm1862 = vcmask 720512
    %v1863 = vsel %vm1862, %v1861, %v1859
    %v1864 = vadd.s32 %v1822, 4294967208
    %v1865 = vperm.slane %v1760, %v1864
    %vm1866 = vcmask 786112
    %v1867 = vsel %vm1866, %v1865, %v1863
    %v1868 = vadd.s32 %v1822, 4294967200
    %v1869 = vperm.slane %v1763, %v1868
    %vm1870 = vcmask 851712
    %v1871 = vsel %vm1870, %v1869, %v1867
    %v1872 = vadd.s32 %v1822, 4294967192
    %v1873 = vperm.slane %v1766, %v1872
    %vm1874 = vcmask 917312
    %v1875 = vsel %vm1874, %v1873, %v1871
    %v1876 = vadd.s32 %v1822, 4294967184
    %v1877 = vperm.slane %v1769, %v1876
    %vm1878 = vcmask 982912
    %v1879 = vsel %vm1878, %v1877, %v1875
    %v1880 = vadd.s32 %v1822, 4294967176
    %v1881 = vperm.slane %v1772, %v1880
    %vm1882 = vcmask 1048512
    %v1883 = vsel %vm1882, %v1881, %v1879
    %v1884 = vperm.slane %v1775, %v1822
    %v1885 = vperm.slane %v1778, %v1824
    %v1886 = vsel %vm1826, %v1885, %v1884
    %v1887 = vperm.slane %v1781, %v1828
    %v1888 = vsel %vm1830, %v1887, %v1886
    %v1889 = vperm.slane %v1784, %v1832
    %v1890 = vsel %vm1834, %v1889, %v1888
    %v1891 = vperm.slane %v1787, %v1836
    %v1892 = vsel %vm1838, %v1891, %v1890
    %v1893 = vperm.slane %v1790, %v1840
    %v1894 = vsel %vm1842, %v1893, %v1892
    %v1895 = vperm.slane %v1793, %v1844
    %v1896 = vsel %vm1846, %v1895, %v1894
    %v1897 = vperm.slane %v1796, %v1848
    %v1898 = vsel %vm1850, %v1897, %v1896
    %v1899 = vperm.slane %v1799, %v1852
    %v1900 = vsel %vm1854, %v1899, %v1898
    %v1901 = vperm.slane %v1802, %v1856
    %v1902 = vsel %vm1858, %v1901, %v1900
    %v1903 = vperm.slane %v1805, %v1860
    %v1904 = vsel %vm1862, %v1903, %v1902
    %v1905 = vperm.slane %v1808, %v1864
    %v1906 = vsel %vm1866, %v1905, %v1904
    %v1907 = vperm.slane %v1811, %v1868
    %v1908 = vsel %vm1870, %v1907, %v1906
    %v1909 = vperm.slane %v1814, %v1872
    %v1910 = vsel %vm1874, %v1909, %v1908
    %v1911 = vperm.slane %v1817, %v1876
    %v1912 = vsel %vm1878, %v1911, %v1910
    %v1913 = vperm.slane %v1820, %v1880
    %v1914 = vsel %vm1882, %v1913, %v1912
    %v1915 = vrot.slane %v1914, 7
    %vm1916 = vcmask 1040384
    %v1917 = vsel %vm1916, %v1883, %v1915
    %v1919 = vlaneseq
    %vm1920 = vcmp.ge.s32.totalorder %v1919, 0
    %vm1921 = vcmp.lt.s32.totalorder %v1919, 256
    %vm1922 = vmand %vm1920, %vm1921
    %1923 = vst.msk [vmem:[#allocation3] sm:$0x3] %vm1922, %v1917
    // Predicated region
    $region22: #{tpu_custom_call.1} parent=1 // pred_check
      _
    $region23: #{tpu_custom_call.1} parent=1 // pred_check_branch
      %1925 = sbr.rel (0) target = $region25
    $region24: #{tpu_custom_call.1} parent=1 // pred_region
      %1927 = vsyncadd [#allocation4], 0
      %s1929 = sshll.u32 [#allocation3], 4
      %s1930 = int_to_ptr.vmem [resolvable:$true] %s1929
      %s1931 = sshll.u32 %s5, 4
      %s1932 = int_to_ptr.hbm [resolvable:$true] %s1931
      %1934 = dma.vmem_to_hbm [thread:$0]  %s1930, 32, %s1932, [#allocation4]
    $region25: #{tpu_custom_call.1} parent=1 // pred_fallthru
      _
    // Predicated region
    $region26: #{tpu_custom_call.1} parent=1 // pred_check
      _
    $region27: #{tpu_custom_call.1} parent=1 // pred_check_branch
      %1936 = sbr.rel (0) target = $region29
    $region28: #{tpu_custom_call.1} parent=1 // pred_region
      %1938 = dma.done [#allocation4], 32
    $region29: #{tpu_custom_call.1} parent=1 // pred_fallthru
      _
    %1939 = vsyncpa [#allocation4], 1

</llo_original>
